<compile_context>
chip_gen: v6e
topology: v6e:2x2x1
jax: 0.10.0
libtpu: 0.0.40
codegen_flags: <defaults>
</compile_context>

<pallas_src>
import functools
import math

import jax
import jax.numpy as jnp
from jax import lax
from jax.experimental import pallas as pl
from jax.experimental.pallas import tpu as pltpu


def _pick_tile(s, pref):
    """Largest tile <= pref that divides s (multiple-of-8 if tiling)."""
    if s <= pref:
        return s
    t = pref
    while t >= 8:
        if s % t == 0:
            return t
        t //= 2
    return s


def _default_exp_bf16():
    """bf16 exp only on chips with a bf16 EUP path (v6e / v7x and newer)."""
    try:
        kind = jax.devices()[0].device_kind.lower()
    except Exception:
        return False
    return not any(t in kind for t in ("v2", "v3", "v4", "v5"))


# ---------------------------------------------------------------------------
# Prologue: fused (all-heads) Q/K/V projections, computed ONCE per token.
# ---------------------------------------------------------------------------
def _qkv_proj_kernel(q_ref, k_ref, v_ref, wq_ref, wk_ref, wv_ref,
                     qp_ref, kp_ref, vp_ref, *, scale):
    qp = lax.dot_general(q_ref[...], wq_ref[...], (((1,), (0,)), ((), ())),
                         preferred_element_type=jnp.float32)
    qp_ref[...] = (qp * scale).astype(qp_ref.dtype)          # fold 1/sqrt(d_k)
    kp_ref[...] = lax.dot_general(
        k_ref[...], wk_ref[...], (((1,), (0,)), ((), ())),
        preferred_element_type=jnp.float32).astype(kp_ref.dtype)
    vp_ref[...] = lax.dot_general(
        v_ref[...], wv_ref[...], (((1,), (0,)), ((), ())),
        preferred_element_type=jnp.float32).astype(vp_ref.dtype)


def _project_qkv(q, k, v, wq_all, wk_all, wv_all, scale, tile_s):
    B, S, d_model = q.shape
    hdq, hdv = wq_all.shape[1], wv_all.shape[1]
    ts = _pick_tile(S, tile_s)
    n_s = S // ts
    bf = jnp.bfloat16

    x_spec = pl.BlockSpec((pl.Squeezed(), ts, d_model), lambda b, si: (b, si, 0))
    w_spec = lambda dout: pl.BlockSpec((d_model, dout), lambda b, si: (0, 0))
    o_spec = lambda dout: pl.BlockSpec((pl.Squeezed(), ts, dout),
                                       lambda b, si: (b, si, 0))
    return pl.pallas_call(
        functools.partial(_qkv_proj_kernel, scale=scale),
        out_shape=(jax.ShapeDtypeStruct((B, S, hdq), bf),
                   jax.ShapeDtypeStruct((B, S, hdq), bf),
                   jax.ShapeDtypeStruct((B, S, hdv), bf)),
        grid_spec=pltpu.PrefetchScalarGridSpec(
            num_scalar_prefetch=0,
            grid=(B, n_s),
            in_specs=[x_spec, x_spec, x_spec,
                      w_spec(hdq), w_spec(hdq), w_spec(hdv)],
            out_specs=[o_spec(hdq), o_spec(hdq), o_spec(hdv)]),
        compiler_params=pltpu.CompilerParams(
            dimension_semantics=("parallel", "parallel")),
    )(q, k, v, wq_all, wk_all, wv_all)


# ---------------------------------------------------------------------------
# Flash-style multi-head attention on pre-projected Q/K/V + fused l_proj.
# ---------------------------------------------------------------------------
def _mha_flash_kernel(
    qp_ref, kp_ref, vp_ref,        # (tq, h*d_qk), (tk, h*d_qk), (tk, h*d_v) bf16
    wl_ref, bl_ref,                # (h*d_v, d_model) bf16, (1, d_model) f32
    o_ref,                         # (tq, d_model) bf16
    ml_ref, acc_ref,               # (tq, 2h) f32 [m|l], (tq, h*d_v) f32
    *, h, d_qk, d_v, exp_bf16,
):
    ki = pl.program_id(2)
    n_k = pl.num_programs(2)
    tq = acc_ref.shape[0]

    @pl.when(ki == 0)
    def _init():
        ml_ref[...] = jnp.concatenate(
            [jnp.full((tq, h), -jnp.inf, dtype=jnp.float32),
             jnp.zeros((tq, h), dtype=jnp.float32)], axis=-1)
        acc_ref[...] = jnp.zeros_like(acc_ref)

    Q = qp_ref[...]                # bf16, already scaled by 1/sqrt(d_k)
    K = kp_ref[...]
    V = vp_ref[...]
    ml = ml_ref[...]               # single dense load of all per-head m/l

    m_cols, l_cols, alphas, pvs = [], [], [], []
    for hi in range(h):
        qs = slice(hi * d_qk, (hi + 1) * d_qk)
        vs = slice(hi * d_v, (hi + 1) * d_v)
        # Contract last dims directly (no explicit K transpose / XLU work).
        s = lax.dot_general(Q[:, qs], K[:, qs], (((1,), (1,)), ((), ())),
                            preferred_element_type=jnp.float32)     # (tq, tk)
        # TODO(synk): mask=True (causal) path would add an upper-triangular
        # -inf bias to `s` here; module is exercised with mask=None.
        m_prev = ml[:, hi:hi + 1]                                    # (tq, 1)
        l_prev = ml[:, h + hi:h + hi + 1]
        m_new = jnp.maximum(m_prev, jnp.max(s, axis=-1, keepdims=True))
        alpha = jnp.exp(m_prev - m_new)                              # f32
        z = s - m_new
        p = jnp.exp(z.astype(jnp.bfloat16)) if exp_bf16 else jnp.exp(z)
        p_sum = jnp.sum(p.astype(jnp.float32), axis=-1, keepdims=True)
        m_cols.append(m_new)
        l_cols.append(alpha * l_prev + p_sum)
        alphas.append(jnp.broadcast_to(alpha, (tq, d_v)))
        pvs.append(lax.dot_general(p.astype(jnp.bfloat16), V[:, vs],
                                   (((1,), (0,)), ((), ())),
                                   preferred_element_type=jnp.float32))

    # Single lane-dense writes (no masked 32-lane column stores).
    ml_ref[...] = jnp.concatenate(m_cols + l_cols, axis=-1)
    acc_ref[...] = (jnp.concatenate(alphas, axis=-1) * acc_ref[...]
                    + jnp.concatenate(pvs, axis=-1))

    @pl.when(ki == n_k - 1)
    def _finalize():
        ml_f = ml_ref[...]
        invs = [jnp.broadcast_to(
                    pl.reciprocal(ml_f[:, h + hi:h + hi + 1], approx=True),
                    (tq, d_v))
                for hi in range(h)]
        concat = (acc_ref[...] * jnp.concatenate(invs, axis=-1)).astype(jnp.bfloat16)
        out = lax.dot_general(concat, wl_ref[...], (((1,), (0,)), ((), ())),
                              preferred_element_type=jnp.float32)
        out = out + bl_ref[...]
        # TODO(synk): dropout (on attn probs and on the l_proj output) is the
        # identity in eval mode; training would use pltpu.prng_seed /
        # pltpu.stateful_bernoulli here.
        o_ref[...] = out.astype(o_ref.dtype)


def _vmem_limit_bytes(tq, tk, d_model, hdq, hdv):
    """~2x honest double-buffered footprint; small, leaves compiler headroom."""
    bf, f32, dbl = 2, 4, 2
    ins = dbl * bf * (tq * hdq + tk * hdq + tk * hdv)          # Qp/Kp/Vp tiles
    weights = dbl * (bf * hdv * d_model + f32 * 8 * 128)       # wl + padded bias
    outs = dbl * bf * tq * d_model
    scratch = f32 * (tq * hdv + tq * 128)                      # acc + padded m/l
    interm = f32 * tq * tk + bf * tq * tk + 2 * f32 * tq * hdv # s, p, pv/alpha
    est = ins + weights + outs + scratch + interm
    return int(min(max(2 * est, 16 << 20), 40 << 20))


@functools.partial(jax.jit,
                   static_argnames=("h", "tile_q", "tile_k", "exp_bf16"))
def multi_head_attention(q, k, v, wq_all, wk_all, wv_all, wl_t, bl, *, h,
                         tile_q=512, tile_k=512, exp_bf16=None):
    """q, k, v: (B, S, d_model) f32 (same shapes).
    wq_all/wk_all/wv_all: (d_model, h*d_head) head-stacked, pre-transposed.
    wl_t: (h*d_V, d_model) pre-transposed l_proj weight; bl: (d_model,) bias.
    Returns bf16 (B, S, d_model)."""
    B, S, d_model = q.shape
    assert q.shape == k.shape == v.shape, "kernel assumes matching q/k/v shapes"
    hdq, hdv = wq_all.shape[1], wv_all.shape[1]
    assert wk_all.shape[1] == hdq, "d_Q must equal d_K for scores"
    assert hdq % h == 0 and hdv % h == 0
    d_qk, d_v = hdq // h, hdv // h
    assert wl_t.shape == (hdv, d_model)
    if exp_bf16 is None:
        exp_bf16 = _default_exp_bf16()

    tq = _pick_tile(S, tile_q)
    tk = _pick_tile(S, tile_k)
    # v7x megacore: keep at least 2 units of work on the parallel (B, q) axes.
    while B * (S // tq) < 2 and tq > 8 and tq % 2 == 0 and S % (tq // 2) == 0:
        tq //= 2
    n_q, n_k = S // tq, S // tk

    bf = jnp.bfloat16
    q, k, v = q.astype(bf), k.astype(bf), v.astype(bf)
    wq_all, wk_all, wv_all, wl_t = (x.astype(bf)
                                    for x in (wq_all, wk_all, wv_all, wl_t))
    bl2 = bl.reshape(1, d_model).astype(jnp.float32)

    # Prologue: project Q/K/V once per token (scale folded into Q).
    qp, kp, vp = _project_qkv(q, k, v, wq_all, wk_all, wv_all,
                              1.0 / math.sqrt(d_qk), tile_q)

    kernel = functools.partial(_mha_flash_kernel, h=h, d_qk=d_qk, d_v=d_v,
                               exp_bf16=bool(exp_bf16))

    qp_spec = pl.BlockSpec((pl.Squeezed(), tq, hdq), lambda b, qi, ki: (b, qi, 0))
    kp_spec = pl.BlockSpec((pl.Squeezed(), tk, hdq), lambda b, qi, ki: (b, ki, 0))
    vp_spec = pl.BlockSpec((pl.Squeezed(), tk, hdv), lambda b, qi, ki: (b, ki, 0))
    wl_spec = pl.BlockSpec((hdv, d_model), lambda b, qi, ki: (0, 0))
    b_spec = pl.BlockSpec((1, d_model), lambda b, qi, ki: (0, 0))
    o_spec = pl.BlockSpec((pl.Squeezed(), tq, d_model), lambda b, qi, ki: (b, qi, 0))

    return pl.pallas_call(
        kernel,
        out_shape=jax.ShapeDtypeStruct((B, S, d_model), bf),
        grid_spec=pltpu.PrefetchScalarGridSpec(
            num_scalar_prefetch=0,
            grid=(B, n_q, n_k),
            in_specs=[qp_spec, kp_spec, vp_spec, wl_spec, b_spec],
            out_specs=o_spec,
            scratch_shapes=[
                pltpu.VMEM((tq, 2 * h), jnp.float32),   # packed running m | l
                pltpu.VMEM((tq, hdv), jnp.float32),     # output accumulator
            ]),
        compiler_params=pltpu.CompilerParams(
            dimension_semantics=("parallel", "parallel", "arbitrary"),
            vmem_limit_bytes=_vmem_limit_bytes(tq, tk, d_model, hdq, hdv),
        ),
    )(qp, kp, vp, wl_t, bl2)


def _reference(q, k, v, wq_heads, wk_heads, wv_heads, wl, bl):
    """Pure-JAX f32 reference mirroring MultiHeadAttentionModule (eval, no mask)."""
    h = wq_heads.shape[0]
    outs = []
    for hi in range(h):
        Q = q @ wq_heads[hi].T
        K = k @ wk_heads[hi].T
        V = v @ wv_heads[hi].T
        d_k = Q.shape[-1]
        scores = jnp.einsum("bqd,bkd->bqk", Q, K) / jnp.sqrt(jnp.float32(d_k))
        attn = jax.nn.softmax(scores, axis=-1)
        outs.append(jnp.einsum("bqk,bkd->bqd", attn, V))
    cat = jnp.concatenate(outs, axis=-1)
    return cat @ wl.T + bl


if __name__ == "__main__":
    # Small shapes consistent with the module's forward; d_model and h*d_V are
    # 128 so the fused projections, accumulator and output are lane-dense.
    B, S, d_model = 2, 8, 128
    h, d_Q, d_K, d_V = 4, 32, 32, 32

    key = jax.random.PRNGKey(0)
    keys = jax.random.split(key, 8)
    q = jax.random.normal(keys[0], (B, S, d_model), dtype=jnp.float32)
    k = jax.random.normal(keys[1], (B, S, d_model), dtype=jnp.float32)
    v = jax.random.normal(keys[2], (B, S, d_model), dtype=jnp.float32)

    # Per-head nn.Linear weights (d_out, d_in layout, default uniform init).
    s_in = 1.0 / math.sqrt(d_model)
    wq_heads = jax.random.uniform(keys[3], (h, d_Q, d_model), minval=-s_in, maxval=s_in)
    wk_heads = jax.random.uniform(keys[4], (h, d_K, d_model), minval=-s_in, maxval=s_in)
    wv_heads = jax.random.uniform(keys[5], (h, d_V, d_model), minval=-s_in, maxval=s_in)
    s_l = 1.0 / math.sqrt(h * d_V)
    wl = jax.random.uniform(keys[6], (d_model, h * d_V), minval=-s_l, maxval=s_l)
    bl = jax.random.uniform(keys[7], (d_model,), minval=-s_l, maxval=s_l)

    # Head-stacked, pre-transposed weights so the kernels compute x @ W.
    wq_all = jnp.concatenate([wq_heads[i].T for i in range(h)], axis=1)
    wk_all = jnp.concatenate([wk_heads[i].T for i in range(h)], axis=1)
    wv_all = jnp.concatenate([wv_heads[i].T for i in range(h)], axis=1)
    wl_t = wl.T

    out = multi_head_attention(q, k, v, wq_all, wk_all, wv_all, wl_t, bl, h=h)
    out = jax.block_until_ready(out).astype(jnp.float32)
    ref = _reference(q, k, v, wq_heads, wk_heads, wv_heads, wl, bl)
    assert out.shape == (B, S, d_model)
    assert jnp.allclose(out, ref, atol=3e-2, rtol=3e-2), (
        f"mismatch vs reference: max abs err {float(jnp.max(jnp.abs(out - ref)))}")

    # Larger sequence (single 512-wide kv tile with default tiling).
    S2 = 512
    q2 = jax.random.normal(keys[0], (B, S2, d_model), dtype=jnp.float32)
    k2 = jax.random.normal(keys[1], (B, S2, d_model), dtype=jnp.float32)
    v2 = jax.random.normal(keys[2], (B, S2, d_model), dtype=jnp.float32)
    out2 = jax.block_until_ready(
        multi_head_attention(q2, k2, v2, wq_all, wk_all, wv_all, wl_t, bl, h=h)
    ).astype(jnp.float32)
    ref2 = _reference(q2, k2, v2, wq_heads, wk_heads, wv_heads, wl, bl)
    assert jnp.allclose(out2, ref2, atol=3e-2, rtol=3e-2), (
        f"mismatch vs reference (512): max abs err "
        f"{float(jnp.max(jnp.abs(out2 - ref2)))}")

    # Same data with smaller explicit tiles to exercise the multi-kv-tile
    # online-softmax path (grid (B, 2, 4)).
    out3 = jax.block_until_ready(
        multi_head_attention(q2, k2, v2, wq_all, wk_all, wv_all, wl_t, bl, h=h,
                             tile_q=256, tile_k=128)
    ).astype(jnp.float32)
    assert jnp.allclose(out3, ref2, atol=3e-2, rtol=3e-2), (
        f"mismatch vs reference (tiled): max abs err "
        f"{float(jnp.max(jnp.abs(out3 - ref2)))}")

    print("KERNEL_OK")
</pallas_src>

<mosaic_0001>
module attributes {stable_mosaic.version = 11 : i64} {
  func.func @_mha_flash_kernel(%arg0: i32, %arg1: i32, %arg2: i32, %arg3: memref<1x8x128xbf16, #tpu.memory_space<vmem>>, %arg4: memref<1x8x128xbf16, #tpu.memory_space<vmem>>, %arg5: memref<1x8x128xbf16, #tpu.memory_space<vmem>>, %arg6: memref<128x128xbf16, #tpu.memory_space<vmem>>, %arg7: memref<1x128xf32, #tpu.memory_space<vmem>>, %arg8: memref<1x8x128xbf16, #tpu.memory_space<vmem>>, %arg9: memref<8x8xf32, #tpu.memory_space<vmem>>, %arg10: memref<8x128xf32, #tpu.memory_space<vmem>>) attributes {dimension_semantics = [#tpu.dimension_semantics<parallel>, #tpu.dimension_semantics<parallel>, #tpu.dimension_semantics<arbitrary>], iteration_bounds = array<i64: 2, 1, 1>, scalar_prefetch = 0 : i64, scratch_operands = 2 : i64, tpu.core_type = #tpu.core_type<tc>, window_params = [{transform_indices = @transform_0, window_bounds = array<i64: 1, 8, 128>}, {transform_indices = @transform_1, window_bounds = array<i64: 1, 8, 128>}, {transform_indices = @transform_2, window_bounds = array<i64: 1, 8, 128>}, {pipeline_mode = #tpu.pipeline_mode<synchronous>, transform_indices = @transform_3, window_bounds = array<i64: 128, 128>}, {pipeline_mode = #tpu.pipeline_mode<synchronous>, transform_indices = @transform_4, window_bounds = array<i64: 1, 128>}, {transform_indices = @transform_5, window_bounds = array<i64: 1, 8, 128>}]} {
    %c0_i32 = arith.constant 0 : i32
    %0 = arith.cmpi eq, %arg2, %c0_i32 : i32
    %1 = arith.extui %0 : i1 to i32
    %c0_i32_0 = arith.constant 0 : i32
    %2 = arith.cmpi ne, %1, %c0_i32_0 : i32
    scf.if %2 {
      %cst_34 = arith.constant 0xFF800000 : f32
      %113 = vector.broadcast %cst_34 : f32 to vector<8x4xf32>
      %cst_35 = arith.constant 0.000000e+00 : f32
      %114 = vector.broadcast %cst_35 : f32 to vector<8x4xf32>
      %115 = tpu.concatenate %113, %114 in 1 : vector<8x4xf32>, vector<8x4xf32> -> vector<8x8xf32>
      %c0_36 = arith.constant 0 : index
      %c0_37 = arith.constant 0 : index
      %116 = vector.load %arg9[%c0_36, %c0_37] : memref<8x8xf32, #tpu.memory_space<vmem>>, vector<8x8xf32>
      tpu.vector_store %arg9[%c0_36, %c0_37], %115 {strides = array<i32>} : memref<8x8xf32, #tpu.memory_space<vmem>>, vector<8x8xf32>,
      %cst_38 = arith.constant 0.000000e+00 : f32
      %117 = vector.broadcast %cst_38 : f32 to vector<8x128xf32>
      %c0_39 = arith.constant 0 : index
      %c0_40 = arith.constant 0 : index
      %118 = vector.load %arg10[%c0_39, %c0_40] : memref<8x128xf32, #tpu.memory_space<vmem>>, vector<8x128xf32>
      tpu.vector_store %arg10[%c0_39, %c0_40], %117 {strides = array<i32>} : memref<8x128xf32, #tpu.memory_space<vmem>>, vector<8x128xf32>,
    } else {
    }
    %c0 = arith.constant 0 : index
    %c0_1 = arith.constant 0 : index
    %c0_2 = arith.constant 0 : index
    %3 = vector.load %arg3[%c0, %c0_1, %c0_2] : memref<1x8x128xbf16, #tpu.memory_space<vmem>>, vector<1x8x128xbf16>
    %4 = vector.shape_cast %3 : vector<1x8x128xbf16> to vector<8x128xbf16>
    %c0_3 = arith.constant 0 : index
    %c0_4 = arith.constant 0 : index
    %c0_5 = arith.constant 0 : index
    %5 = vector.load %arg4[%c0_3, %c0_4, %c0_5] : memref<1x8x128xbf16, #tpu.memory_space<vmem>>, vector<1x8x128xbf16>
    %6 = vector.shape_cast %5 : vector<1x8x128xbf16> to vector<8x128xbf16>
    %c0_6 = arith.constant 0 : index
    %c0_7 = arith.constant 0 : index
    %c0_8 = arith.constant 0 : index
    %7 = vector.load %arg5[%c0_6, %c0_7, %c0_8] : memref<1x8x128xbf16, #tpu.memory_space<vmem>>, vector<1x8x128xbf16>
    %8 = vector.shape_cast %7 : vector<1x8x128xbf16> to vector<8x128xbf16>
    %c0_9 = arith.constant 0 : index
    %c0_10 = arith.constant 0 : index
    %9 = vector.load %arg9[%c0_9, %c0_10] : memref<8x8xf32, #tpu.memory_space<vmem>>, vector<8x8xf32>
    %10 = vector.extract_strided_slice %4 {offsets = [0, 0], sizes = [8, 32], strides = [1, 1]} : vector<8x128xbf16> to vector<8x32xbf16>
    %11 = vector.extract_strided_slice %6 {offsets = [0, 0], sizes = [8, 32], strides = [1, 1]} : vector<8x128xbf16> to vector<8x32xbf16>
    %cst = arith.constant dense<0.000000e+00> : vector<8x8xf32>
    %12 = tpu.matmul %10, %11, %cst {dimension_numbers = #tpu.dot_dimension_numbers<[1], [1], [0], [0], [0, 0, 1, 0], [], []>} : vector<8x32xbf16>, vector<8x32xbf16>, vector<8x8xf32> -> vector<8x8xf32>
    %13 = vector.extract_strided_slice %9 {offsets = [0, 0], sizes = [8, 1], strides = [1, 1]} : vector<8x8xf32> to vector<8x1xf32>
    %14 = vector.extract_strided_slice %9 {offsets = [0, 4], sizes = [8, 1], strides = [1, 1]} : vector<8x8xf32> to vector<8x1xf32>
    %cst_11 = arith.constant dense<0xFF800000> : vector<8xf32>
    %15 = vector.multi_reduction <maximumf>, %12, %cst_11 [1] : vector<8x8xf32> to vector<8xf32>
    %16 = vector.shape_cast %15 : vector<8xf32> to vector<8x1xf32>
    %17 = arith.maximumf %13, %16 : vector<8x1xf32>
    %18 = arith.subf %13, %17 : vector<8x1xf32>
    %19 = math.exp %18 : vector<8x1xf32>
    %20 = vector.broadcast %17 : vector<8x1xf32> to vector<8x8xf32>
    %21 = arith.subf %12, %20 : vector<8x8xf32>
    %22 = arith.truncf %21 : vector<8x8xf32> to vector<8x8xbf16>
    %23 = math.exp %22 : vector<8x8xbf16>
    %24 = arith.extf %23 : vector<8x8xbf16> to vector<8x8xf32>
    %cst_12 = arith.constant dense<0.000000e+00> : vector<8xf32>
    %25 = vector.multi_reduction <add>, %24, %cst_12 [1] : vector<8x8xf32> to vector<8xf32>
    %26 = vector.shape_cast %25 : vector<8xf32> to vector<8x1xf32>
    %27 = arith.mulf %19, %14 : vector<8x1xf32>
    %28 = arith.addf %27, %26 : vector<8x1xf32>
    %29 = vector.shape_cast %19 : vector<8x1xf32> to vector<8x1xf32>
    %30 = vector.broadcast %29 : vector<8x1xf32> to vector<8x32xf32>
    %31 = vector.extract_strided_slice %8 {offsets = [0, 0], sizes = [8, 32], strides = [1, 1]} : vector<8x128xbf16> to vector<8x32xbf16>
    %cst_13 = arith.constant dense<0.000000e+00> : vector<8x32xf32>
    %32 = tpu.matmul %23, %31, %cst_13 {dimension_numbers = #tpu.dot_dimension_numbers<[1], [0], [0], [1], [0, 0, 1, 1], [], []>} : vector<8x8xbf16>, vector<8x32xbf16>, vector<8x32xf32> -> vector<8x32xf32>
    %33 = vector.extract_strided_slice %4 {offsets = [0, 32], sizes = [8, 32], strides = [1, 1]} : vector<8x128xbf16> to vector<8x32xbf16>
    %34 = vector.extract_strided_slice %6 {offsets = [0, 32], sizes = [8, 32], strides = [1, 1]} : vector<8x128xbf16> to vector<8x32xbf16>
    %cst_14 = arith.constant dense<0.000000e+00> : vector<8x8xf32>
    %35 = tpu.matmul %33, %34, %cst_14 {dimension_numbers = #tpu.dot_dimension_numbers<[1], [1], [0], [0], [0, 0, 1, 0], [], []>} : vector<8x32xbf16>, vector<8x32xbf16>, vector<8x8xf32> -> vector<8x8xf32>
    %36 = vector.extract_strided_slice %9 {offsets = [0, 1], sizes = [8, 1], strides = [1, 1]} : vector<8x8xf32> to vector<8x1xf32>
    %37 = vector.extract_strided_slice %9 {offsets = [0, 5], sizes = [8, 1], strides = [1, 1]} : vector<8x8xf32> to vector<8x1xf32>
    %cst_15 = arith.constant dense<0xFF800000> : vector<8xf32>
    %38 = vector.multi_reduction <maximumf>, %35, %cst_15 [1] : vector<8x8xf32> to vector<8xf32>
    %39 = vector.shape_cast %38 : vector<8xf32> to vector<8x1xf32>
    %40 = arith.maximumf %36, %39 : vector<8x1xf32>
    %41 = arith.subf %36, %40 : vector<8x1xf32>
    %42 = math.exp %41 : vector<8x1xf32>
    %43 = vector.broadcast %40 : vector<8x1xf32> to vector<8x8xf32>
    %44 = arith.subf %35, %43 : vector<8x8xf32>
    %45 = arith.truncf %44 : vector<8x8xf32> to vector<8x8xbf16>
    %46 = math.exp %45 : vector<8x8xbf16>
    %47 = arith.extf %46 : vector<8x8xbf16> to vector<8x8xf32>
    %cst_16 = arith.constant dense<0.000000e+00> : vector<8xf32>
    %48 = vector.multi_reduction <add>, %47, %cst_16 [1] : vector<8x8xf32> to vector<8xf32>
    %49 = vector.shape_cast %48 : vector<8xf32> to vector<8x1xf32>
    %50 = arith.mulf %42, %37 : vector<8x1xf32>
    %51 = arith.addf %50, %49 : vector<8x1xf32>
    %52 = vector.shape_cast %42 : vector<8x1xf32> to vector<8x1xf32>
    %53 = vector.broadcast %52 : vector<8x1xf32> to vector<8x32xf32>
    %54 = vector.extract_strided_slice %8 {offsets = [0, 32], sizes = [8, 32], strides = [1, 1]} : vector<8x128xbf16> to vector<8x32xbf16>
    %cst_17 = arith.constant dense<0.000000e+00> : vector<8x32xf32>
    %55 = tpu.matmul %46, %54, %cst_17 {dimension_numbers = #tpu.dot_dimension_numbers<[1], [0], [0], [1], [0, 0, 1, 1], [], []>} : vector<8x8xbf16>, vector<8x32xbf16>, vector<8x32xf32> -> vector<8x32xf32>
    %56 = vector.extract_strided_slice %4 {offsets = [0, 64], sizes = [8, 32], strides = [1, 1]} : vector<8x128xbf16> to vector<8x32xbf16>
    %57 = vector.extract_strided_slice %6 {offsets = [0, 64], sizes = [8, 32], strides = [1, 1]} : vector<8x128xbf16> to vector<8x32xbf16>
    %cst_18 = arith.constant dense<0.000000e+00> : vector<8x8xf32>
    %58 = tpu.matmul %56, %57, %cst_18 {dimension_numbers = #tpu.dot_dimension_numbers<[1], [1], [0], [0], [0, 0, 1, 0], [], []>} : vector<8x32xbf16>, vector<8x32xbf16>, vector<8x8xf32> -> vector<8x8xf32>
    %59 = vector.extract_strided_slice %9 {offsets = [0, 2], sizes = [8, 1], strides = [1, 1]} : vector<8x8xf32> to vector<8x1xf32>
    %60 = vector.extract_strided_slice %9 {offsets = [0, 6], sizes = [8, 1], strides = [1, 1]} : vector<8x8xf32> to vector<8x1xf32>
    %cst_19 = arith.constant dense<0xFF800000> : vector<8xf32>
    %61 = vector.multi_reduction <maximumf>, %58, %cst_19 [1] : vector<8x8xf32> to vector<8xf32>
    %62 = vector.shape_cast %61 : vector<8xf32> to vector<8x1xf32>
    %63 = arith.maximumf %59, %62 : vector<8x1xf32>
    %64 = arith.subf %59, %63 : vector<8x1xf32>
    %65 = math.exp %64 : vector<8x1xf32>
    %66 = vector.broadcast %63 : vector<8x1xf32> to vector<8x8xf32>
    %67 = arith.subf %58, %66 : vector<8x8xf32>
    %68 = arith.truncf %67 : vector<8x8xf32> to vector<8x8xbf16>
    %69 = math.exp %68 : vector<8x8xbf16>
    %70 = arith.extf %69 : vector<8x8xbf16> to vector<8x8xf32>
    %cst_20 = arith.constant dense<0.000000e+00> : vector<8xf32>
    %71 = vector.multi_reduction <add>, %70, %cst_20 [1] : vector<8x8xf32> to vector<8xf32>
    %72 = vector.shape_cast %71 : vector<8xf32> to vector<8x1xf32>
    %73 = arith.mulf %65, %60 : vector<8x1xf32>
    %74 = arith.addf %73, %72 : vector<8x1xf32>
    %75 = vector.shape_cast %65 : vector<8x1xf32> to vector<8x1xf32>
    %76 = vector.broadcast %75 : vector<8x1xf32> to vector<8x32xf32>
    %77 = vector.extract_strided_slice %8 {offsets = [0, 64], sizes = [8, 32], strides = [1, 1]} : vector<8x128xbf16> to vector<8x32xbf16>
    %cst_21 = arith.constant dense<0.000000e+00> : vector<8x32xf32>
    %78 = tpu.matmul %69, %77, %cst_21 {dimension_numbers = #tpu.dot_dimension_numbers<[1], [0], [0], [1], [0, 0, 1, 1], [], []>} : vector<8x8xbf16>, vector<8x32xbf16>, vector<8x32xf32> -> vector<8x32xf32>
    %79 = vector.extract_strided_slice %4 {offsets = [0, 96], sizes = [8, 32], strides = [1, 1]} : vector<8x128xbf16> to vector<8x32xbf16>
    %80 = vector.extract_strided_slice %6 {offsets = [0, 96], sizes = [8, 32], strides = [1, 1]} : vector<8x128xbf16> to vector<8x32xbf16>
    %cst_22 = arith.constant dense<0.000000e+00> : vector<8x8xf32>
    %81 = tpu.matmul %79, %80, %cst_22 {dimension_numbers = #tpu.dot_dimension_numbers<[1], [1], [0], [0], [0, 0, 1, 0], [], []>} : vector<8x32xbf16>, vector<8x32xbf16>, vector<8x8xf32> -> vector<8x8xf32>
    %82 = vector.extract_strided_slice %9 {offsets = [0, 3], sizes = [8, 1], strides = [1, 1]} : vector<8x8xf32> to vector<8x1xf32>
    %83 = vector.extract_strided_slice %9 {offsets = [0, 7], sizes = [8, 1], strides = [1, 1]} : vector<8x8xf32> to vector<8x1xf32>
    %cst_23 = arith.constant dense<0xFF800000> : vector<8xf32>
    %84 = vector.multi_reduction <maximumf>, %81, %cst_23 [1] : vector<8x8xf32> to vector<8xf32>
    %85 = vector.shape_cast %84 : vector<8xf32> to vector<8x1xf32>
    %86 = arith.maximumf %82, %85 : vector<8x1xf32>
    %87 = arith.subf %82, %86 : vector<8x1xf32>
    %88 = math.exp %87 : vector<8x1xf32>
    %89 = vector.broadcast %86 : vector<8x1xf32> to vector<8x8xf32>
    %90 = arith.subf %81, %89 : vector<8x8xf32>
    %91 = arith.truncf %90 : vector<8x8xf32> to vector<8x8xbf16>
    %92 = math.exp %91 : vector<8x8xbf16>
    %93 = arith.extf %92 : vector<8x8xbf16> to vector<8x8xf32>
    %cst_24 = arith.constant dense<0.000000e+00> : vector<8xf32>
    %94 = vector.multi_reduction <add>, %93, %cst_24 [1] : vector<8x8xf32> to vector<8xf32>
    %95 = vector.shape_cast %94 : vector<8xf32> to vector<8x1xf32>
    %96 = arith.mulf %88, %83 : vector<8x1xf32>
    %97 = arith.addf %96, %95 : vector<8x1xf32>
    %98 = vector.shape_cast %88 : vector<8x1xf32> to vector<8x1xf32>
    %99 = vector.broadcast %98 : vector<8x1xf32> to vector<8x32xf32>
    %100 = vector.extract_strided_slice %8 {offsets = [0, 96], sizes = [8, 32], strides = [1, 1]} : vector<8x128xbf16> to vector<8x32xbf16>
    %cst_25 = arith.constant dense<0.000000e+00> : vector<8x32xf32>
    %101 = tpu.matmul %92, %100, %cst_25 {dimension_numbers = #tpu.dot_dimension_numbers<[1], [0], [0], [1], [0, 0, 1, 1], [], []>} : vector<8x8xbf16>, vector<8x32xbf16>, vector<8x32xf32> -> vector<8x32xf32>
    %102 = tpu.concatenate %17, %40, %63, %86, %28, %51, %74, %97 in 1 : vector<8x1xf32>, vector<8x1xf32>, vector<8x1xf32>, vector<8x1xf32>, vector<8x1xf32>, vector<8x1xf32>, vector<8x1xf32>, vector<8x1xf32> -> vector<8x8xf32>
    %c0_26 = arith.constant 0 : index
    %c0_27 = arith.constant 0 : index
    %103 = vector.load %arg9[%c0_26, %c0_27] : memref<8x8xf32, #tpu.memory_space<vmem>>, vector<8x8xf32>
    tpu.vector_store %arg9[%c0_26, %c0_27], %102 {strides = array<i32>} : memref<8x8xf32, #tpu.memory_space<vmem>>, vector<8x8xf32>,
    %104 = tpu.concatenate %30, %53, %76, %99 in 1 : vector<8x32xf32>, vector<8x32xf32>, vector<8x32xf32>, vector<8x32xf32> -> vector<8x128xf32>
    %c0_28 = arith.constant 0 : index
    %c0_29 = arith.constant 0 : index
    %105 = vector.load %arg10[%c0_28, %c0_29] : memref<8x128xf32, #tpu.memory_space<vmem>>, vector<8x128xf32>
    %106 = arith.mulf %104, %105 : vector<8x128xf32>
    %107 = tpu.concatenate %32, %55, %78, %101 in 1 : vector<8x32xf32>, vector<8x32xf32>, vector<8x32xf32>, vector<8x32xf32> -> vector<8x128xf32>
    %108 = arith.addf %106, %107 : vector<8x128xf32>
    %c0_30 = arith.constant 0 : index
    %c0_31 = arith.constant 0 : index
    %109 = vector.load %arg10[%c0_30, %c0_31] : memref<8x128xf32, #tpu.memory_space<vmem>>, vector<8x128xf32>
    tpu.vector_store %arg10[%c0_30, %c0_31], %108 {strides = array<i32>} : memref<8x128xf32, #tpu.memory_space<vmem>>, vector<8x128xf32>,
    %c0_i32_32 = arith.constant 0 : i32
    %110 = arith.cmpi eq, %arg2, %c0_i32_32 : i32
    %111 = arith.extui %110 : i1 to i32
    %c0_i32_33 = arith.constant 0 : i32
    %112 = arith.cmpi ne, %111, %c0_i32_33 : i32
    scf.if %112 {
      %c0_34 = arith.constant 0 : index
      %c0_35 = arith.constant 0 : index
      %113 = vector.load %arg9[%c0_34, %c0_35] : memref<8x8xf32, #tpu.memory_space<vmem>>, vector<8x8xf32>
      %114 = vector.extract_strided_slice %113 {offsets = [0, 4], sizes = [8, 1], strides = [1, 1]} : vector<8x8xf32> to vector<8x1xf32>
      %115 = tpu.reciprocal %114 {approx = true} : vector<8x1xf32> -> vector<8x1xf32>
      %116 = vector.shape_cast %115 : vector<8x1xf32> to vector<8x1xf32>
      %117 = vector.broadcast %116 : vector<8x1xf32> to vector<8x32xf32>
      %118 = vector.extract_strided_slice %113 {offsets = [0, 5], sizes = [8, 1], strides = [1, 1]} : vector<8x8xf32> to vector<8x1xf32>
      %119 = tpu.reciprocal %118 {approx = true} : vector<8x1xf32> -> vector<8x1xf32>
      %120 = vector.shape_cast %119 : vector<8x1xf32> to vector<8x1xf32>
      %121 = vector.broadcast %120 : vector<8x1xf32> to vector<8x32xf32>
      %122 = vector.extract_strided_slice %113 {offsets = [0, 6], sizes = [8, 1], strides = [1, 1]} : vector<8x8xf32> to vector<8x1xf32>
      %123 = tpu.reciprocal %122 {approx = true} : vector<8x1xf32> -> vector<8x1xf32>
      %124 = vector.shape_cast %123 : vector<8x1xf32> to vector<8x1xf32>
      %125 = vector.broadcast %124 : vector<8x1xf32> to vector<8x32xf32>
      %126 = vector.extract_strided_slice %113 {offsets = [0, 7], sizes = [8, 1], strides = [1, 1]} : vector<8x8xf32> to vector<8x1xf32>
      %127 = tpu.reciprocal %126 {approx = true} : vector<8x1xf32> -> vector<8x1xf32>
      %128 = vector.shape_cast %127 : vector<8x1xf32> to vector<8x1xf32>
      %129 = vector.broadcast %128 : vector<8x1xf32> to vector<8x32xf32>
      %c0_36 = arith.constant 0 : index
      %c0_37 = arith.constant 0 : index
      %130 = vector.load %arg10[%c0_36, %c0_37] : memref<8x128xf32, #tpu.memory_space<vmem>>, vector<8x128xf32>
      %131 = tpu.concatenate %117, %121, %125, %129 in 1 : vector<8x32xf32>, vector<8x32xf32>, vector<8x32xf32>, vector<8x32xf32> -> vector<8x128xf32>
      %132 = arith.mulf %130, %131 : vector<8x128xf32>
      %133 = arith.truncf %132 : vector<8x128xf32> to vector<8x128xbf16>
      %c0_38 = arith.constant 0 : index
      %c0_39 = arith.constant 0 : index
      %134 = vector.load %arg6[%c0_38, %c0_39] : memref<128x128xbf16, #tpu.memory_space<vmem>>, vector<128x128xbf16>
      %cst_40 = arith.constant dense<0.000000e+00> : vector<8x128xf32>
      %135 = tpu.matmul %133, %134, %cst_40 {dimension_numbers = #tpu.dot_dimension_numbers<[1], [0], [0], [1], [0, 0, 1, 1], [], []>} : vector<8x128xbf16>, vector<128x128xbf16>, vector<8x128xf32> -> vector<8x128xf32>
      %c0_41 = arith.constant 0 : index
      %c0_42 = arith.constant 0 : index
      %136 = vector.load %arg7[%c0_41, %c0_42] : memref<1x128xf32, #tpu.memory_space<vmem>>, vector<1x128xf32>
      %137 = vector.broadcast %136 : vector<1x128xf32> to vector<8x128xf32>
      %138 = arith.addf %135, %137 : vector<8x128xf32>
      %139 = arith.truncf %138 : vector<8x128xf32> to vector<8x128xbf16>
      %c0_43 = arith.constant 0 : index
      %c0_44 = arith.constant 0 : index
      %c0_45 = arith.constant 0 : index
      %140 = vector.load %arg8[%c0_43, %c0_44, %c0_45] : memref<1x8x128xbf16, #tpu.memory_space<vmem>>, vector<1x8x128xbf16>
      %141 = vector.shape_cast %140 : vector<1x8x128xbf16> to vector<8x128xbf16>
      %142 = vector.shape_cast %139 : vector<8x128xbf16> to vector<1x8x128xbf16>
      tpu.vector_store %arg8[%c0_43, %c0_44, %c0_45], %142 {strides = array<i32>} : memref<1x8x128xbf16, #tpu.memory_space<vmem>>, vector<1x8x128xbf16>,
    } else {
    }
    return
  }
  func.func @transform_0(%arg0: i32, %arg1: i32, %arg2: i32) -> (i32, i32, i32) {
    %c0_i32 = arith.constant 0 : i32
    %c0_i32_0 = arith.constant 0 : i32
    return %arg0, %arg1, %c0_i32 : i32, i32, i32
  }
  func.func @transform_1(%arg0: i32, %arg1: i32, %arg2: i32) -> (i32, i32, i32) {
    %c0_i32 = arith.constant 0 : i32
    %c0_i32_0 = arith.constant 0 : i32
    return %arg0, %arg2, %c0_i32 : i32, i32, i32
  }
  func.func @transform_2(%arg0: i32, %arg1: i32, %arg2: i32) -> (i32, i32, i32) {
    %c0_i32 = arith.constant 0 : i32
    %c0_i32_0 = arith.constant 0 : i32
    return %arg0, %arg2, %c0_i32 : i32, i32, i32
  }
  func.func @transform_3(%arg0: i32, %arg1: i32, %arg2: i32) -> (i32, i32) {
    %c0_i32 = arith.constant 0 : i32
    %c0_i32_0 = arith.constant 0 : i32
    %c0_i32_1 = arith.constant 0 : i32
    return %c0_i32, %c0_i32_0 : i32, i32
  }
  func.func @transform_4(%arg0: i32, %arg1: i32, %arg2: i32) -> (i32, i32) {
    %c0_i32 = arith.constant 0 : i32
    %c0_i32_0 = arith.constant 0 : i32
    %c0_i32_1 = arith.constant 0 : i32
    return %c0_i32, %c0_i32_0 : i32, i32
  }
  func.func @transform_5(%arg0: i32, %arg1: i32, %arg2: i32) -> (i32, i32, i32) {
    %c0_i32 = arith.constant 0 : i32
    %c0_i32_0 = arith.constant 0 : i32
    return %arg0, %arg1, %c0_i32 : i32, i32, i32
  }
}

module attributes {stable_mosaic.version = 11 : i64} {
  func.func @_qkv_proj_kernel(%arg0: i32, %arg1: i32, %arg2: memref<1x8x128xbf16, #tpu.memory_space<vmem>>, %arg3: memref<1x8x128xbf16, #tpu.memory_space<vmem>>, %arg4: memref<1x8x128xbf16, #tpu.memory_space<vmem>>, %arg5: memref<128x128xbf16, #tpu.memory_space<vmem>>, %arg6: memref<128x128xbf16, #tpu.memory_space<vmem>>, %arg7: memref<128x128xbf16, #tpu.memory_space<vmem>>, %arg8: memref<1x8x128xbf16, #tpu.memory_space<vmem>>, %arg9: memref<1x8x128xbf16, #tpu.memory_space<vmem>>, %arg10: memref<1x8x128xbf16, #tpu.memory_space<vmem>>) attributes {dimension_semantics = [#tpu.dimension_semantics<parallel>, #tpu.dimension_semantics<parallel>], iteration_bounds = array<i64: 2, 1>, scalar_prefetch = 0 : i64, scratch_operands = 0 : i64, tpu.core_type = #tpu.core_type<tc>, window_params = [{transform_indices = @transform_0, window_bounds = array<i64: 1, 8, 128>}, {transform_indices = @transform_1, window_bounds = array<i64: 1, 8, 128>}, {transform_indices = @transform_2, window_bounds = array<i64: 1, 8, 128>}, {pipeline_mode = #tpu.pipeline_mode<synchronous>, transform_indices = @transform_3, window_bounds = array<i64: 128, 128>}, {pipeline_mode = #tpu.pipeline_mode<synchronous>, transform_indices = @transform_4, window_bounds = array<i64: 128, 128>}, {pipeline_mode = #tpu.pipeline_mode<synchronous>, transform_indices = @transform_5, window_bounds = array<i64: 128, 128>}, {transform_indices = @transform_6, window_bounds = array<i64: 1, 8, 128>}, {transform_indices = @transform_7, window_bounds = array<i64: 1, 8, 128>}, {transform_indices = @transform_8, window_bounds = array<i64: 1, 8, 128>}]} {
    %c0 = arith.constant 0 : index
    %c0_0 = arith.constant 0 : index
    %c0_1 = arith.constant 0 : index
    %0 = vector.load %arg2[%c0, %c0_0, %c0_1] : memref<1x8x128xbf16, #tpu.memory_space<vmem>>, vector<1x8x128xbf16>
    %1 = vector.shape_cast %0 : vector<1x8x128xbf16> to vector<8x128xbf16>
    %c0_2 = arith.constant 0 : index
    %c0_3 = arith.constant 0 : index
    %2 = vector.load %arg5[%c0_2, %c0_3] : memref<128x128xbf16, #tpu.memory_space<vmem>>, vector<128x128xbf16>
    %cst = arith.constant dense<0.000000e+00> : vector<8x128xf32>
    %3 = tpu.matmul %1, %2, %cst {dimension_numbers = #tpu.dot_dimension_numbers<[1], [0], [0], [1], [0, 0, 1, 1], [], []>} : vector<8x128xbf16>, vector<128x128xbf16>, vector<8x128xf32> -> vector<8x128xf32>
    %cst_4 = arith.constant 0.176776692 : f32
    %4 = vector.broadcast %cst_4 : f32 to vector<8x128xf32>
    %5 = arith.mulf %3, %4 : vector<8x128xf32>
    %6 = arith.truncf %5 : vector<8x128xf32> to vector<8x128xbf16>
    %c0_5 = arith.constant 0 : index
    %c0_6 = arith.constant 0 : index
    %c0_7 = arith.constant 0 : index
    %7 = vector.load %arg8[%c0_5, %c0_6, %c0_7] : memref<1x8x128xbf16, #tpu.memory_space<vmem>>, vector<1x8x128xbf16>
    %8 = vector.shape_cast %7 : vector<1x8x128xbf16> to vector<8x128xbf16>
    %9 = vector.shape_cast %6 : vector<8x128xbf16> to vector<1x8x128xbf16>
    tpu.vector_store %arg8[%c0_5, %c0_6, %c0_7], %9 {strides = array<i32>} : memref<1x8x128xbf16, #tpu.memory_space<vmem>>, vector<1x8x128xbf16>,
    %c0_8 = arith.constant 0 : index
    %c0_9 = arith.constant 0 : index
    %c0_10 = arith.constant 0 : index
    %10 = vector.load %arg3[%c0_8, %c0_9, %c0_10] : memref<1x8x128xbf16, #tpu.memory_space<vmem>>, vector<1x8x128xbf16>
    %11 = vector.shape_cast %10 : vector<1x8x128xbf16> to vector<8x128xbf16>
    %c0_11 = arith.constant 0 : index
    %c0_12 = arith.constant 0 : index
    %12 = vector.load %arg6[%c0_11, %c0_12] : memref<128x128xbf16, #tpu.memory_space<vmem>>, vector<128x128xbf16>
    %cst_13 = arith.constant dense<0.000000e+00> : vector<8x128xf32>
    %13 = tpu.matmul %11, %12, %cst_13 {dimension_numbers = #tpu.dot_dimension_numbers<[1], [0], [0], [1], [0, 0, 1, 1], [], []>} : vector<8x128xbf16>, vector<128x128xbf16>, vector<8x128xf32> -> vector<8x128xf32>
    %14 = arith.truncf %13 : vector<8x128xf32> to vector<8x128xbf16>
    %c0_14 = arith.constant 0 : index
    %c0_15 = arith.constant 0 : index
    %c0_16 = arith.constant 0 : index
    %15 = vector.load %arg9[%c0_14, %c0_15, %c0_16] : memref<1x8x128xbf16, #tpu.memory_space<vmem>>, vector<1x8x128xbf16>
    %16 = vector.shape_cast %15 : vector<1x8x128xbf16> to vector<8x128xbf16>
    %17 = vector.shape_cast %14 : vector<8x128xbf16> to vector<1x8x128xbf16>
    tpu.vector_store %arg9[%c0_14, %c0_15, %c0_16], %17 {strides = array<i32>} : memref<1x8x128xbf16, #tpu.memory_space<vmem>>, vector<1x8x128xbf16>,
    %c0_17 = arith.constant 0 : index
    %c0_18 = arith.constant 0 : index
    %c0_19 = arith.constant 0 : index
    %18 = vector.load %arg4[%c0_17, %c0_18, %c0_19] : memref<1x8x128xbf16, #tpu.memory_space<vmem>>, vector<1x8x128xbf16>
    %19 = vector.shape_cast %18 : vector<1x8x128xbf16> to vector<8x128xbf16>
    %c0_20 = arith.constant 0 : index
    %c0_21 = arith.constant 0 : index
    %20 = vector.load %arg7[%c0_20, %c0_21] : memref<128x128xbf16, #tpu.memory_space<vmem>>, vector<128x128xbf16>
    %cst_22 = arith.constant dense<0.000000e+00> : vector<8x128xf32>
    %21 = tpu.matmul %19, %20, %cst_22 {dimension_numbers = #tpu.dot_dimension_numbers<[1], [0], [0], [1], [0, 0, 1, 1], [], []>} : vector<8x128xbf16>, vector<128x128xbf16>, vector<8x128xf32> -> vector<8x128xf32>
    %22 = arith.truncf %21 : vector<8x128xf32> to vector<8x128xbf16>
    %c0_23 = arith.constant 0 : index
    %c0_24 = arith.constant 0 : index
    %c0_25 = arith.constant 0 : index
    %23 = vector.load %arg10[%c0_23, %c0_24, %c0_25] : memref<1x8x128xbf16, #tpu.memory_space<vmem>>, vector<1x8x128xbf16>
    %24 = vector.shape_cast %23 : vector<1x8x128xbf16> to vector<8x128xbf16>
    %25 = vector.shape_cast %22 : vector<8x128xbf16> to vector<1x8x128xbf16>
    tpu.vector_store %arg10[%c0_23, %c0_24, %c0_25], %25 {strides = array<i32>} : memref<1x8x128xbf16, #tpu.memory_space<vmem>>, vector<1x8x128xbf16>,
    return
  }
  func.func @transform_0(%arg0: i32, %arg1: i32) -> (i32, i32, i32) {
    %c0_i32 = arith.constant 0 : i32
    %c0_i32_0 = arith.constant 0 : i32
    return %arg0, %arg1, %c0_i32 : i32, i32, i32
  }
  func.func @transform_1(%arg0: i32, %arg1: i32) -> (i32, i32, i32) {
    %c0_i32 = arith.constant 0 : i32
    %c0_i32_0 = arith.constant 0 : i32
    return %arg0, %arg1, %c0_i32 : i32, i32, i32
  }
  func.func @transform_2(%arg0: i32, %arg1: i32) -> (i32, i32, i32) {
    %c0_i32 = arith.constant 0 : i32
    %c0_i32_0 = arith.constant 0 : i32
    return %arg0, %arg1, %c0_i32 : i32, i32, i32
  }
  func.func @transform_3(%arg0: i32, %arg1: i32) -> (i32, i32) {
    %c0_i32 = arith.constant 0 : i32
    %c0_i32_0 = arith.constant 0 : i32
    %c0_i32_1 = arith.constant 0 : i32
    return %c0_i32, %c0_i32_0 : i32, i32
  }
  func.func @transform_4(%arg0: i32, %arg1: i32) -> (i32, i32) {
    %c0_i32 = arith.constant 0 : i32
    %c0_i32_0 = arith.constant 0 : i32
    %c0_i32_1 = arith.constant 0 : i32
    return %c0_i32, %c0_i32_0 : i32, i32
  }
  func.func @transform_5(%arg0: i32, %arg1: i32) -> (i32, i32) {
    %c0_i32 = arith.constant 0 : i32
    %c0_i32_0 = arith.constant 0 : i32
    %c0_i32_1 = arith.constant 0 : i32
    return %c0_i32, %c0_i32_0 : i32, i32
  }
  func.func @transform_6(%arg0: i32, %arg1: i32) -> (i32, i32, i32) {
    %c0_i32 = arith.constant 0 : i32
    %c0_i32_0 = arith.constant 0 : i32
    return %arg0, %arg1, %c0_i32 : i32, i32, i32
  }
  func.func @transform_7(%arg0: i32, %arg1: i32) -> (i32, i32, i32) {
    %c0_i32 = arith.constant 0 : i32
    %c0_i32_0 = arith.constant 0 : i32
    return %arg0, %arg1, %c0_i32 : i32, i32, i32
  }
  func.func @transform_8(%arg0: i32, %arg1: i32) -> (i32, i32, i32) {
    %c0_i32 = arith.constant 0 : i32
    %c0_i32_0 = arith.constant 0 : i32
    return %arg0, %arg1, %c0_i32 : i32, i32, i32
  }
}

</mosaic_0001>

<llo_original>
// kernel: multi_head_attention.3
$region0: #{multi_head_attention.3}
  #allocation0 [shape = 'u32[]', space=smem, size = 0x4, offset = 0x4, fixed_abs, tag = 'smem constant byte address 0x4 - core index']
  #allocation1 [shape = 'u32[144,128]{1,0:T(1,128)}', space=vmem, size = 0x12000, scoped, tag = 'internal scratch']
  #allocation2 [shape = 'f32[8,8]{1,0:T(8,128)}', space=vmem, size = 0x1000, scoped, tag = 'scratch operand']
  #allocation3 [shape = 'f32[8,128]{1,0:T(8,128)}', space=vmem, size = 0x1000, scoped, tag = 'scratch operand']
  %s0 = inlined_call_operand.vmem [shape: bf16[2,8,128], index: 0, kind: input, shape index: {}]
  %s1 = inlined_call_operand.vmem [shape: bf16[2,8,128], index: 1, kind: input, shape index: {}]
  %s2 = inlined_call_operand.vmem [shape: bf16[2,8,128], index: 2, kind: input, shape index: {}]
  %s3 = inlined_call_operand.vmem [shape: bf16[128,128], index: 3, kind: input, shape index: {}]
  %s4 = inlined_call_operand.vmem [shape: f32[1,128], index: 4, kind: input, shape index: {}]
  %s5 = inlined_call_operand.hbm [shape: bf16[2,8,128], index: 5, kind: output, shape index: {}]
  %s6 = sld [smem:[#allocation0]]
  $region61: #{multi_head_attention.3} parent=0
    _
  %s8 = ssub.s32 1, %s6
  %s9 = scalar_select 0, %s8, %s6
  $region1: #{multi_head_attention.3} parent=0
    #allocation4 [shape = 'u8[4096]{0}', space=vmem, size = 0x1000, scoped, tag = 'output window, operand 0']
    #allocation5 [shape = 's32[2]{0}', space=sflag, size = 0x8, scoped, tag = 'scoped memory for multi_head_attention.3']
    %10 = vsyncpa [#allocation5], 0
    %s11 = scalar_lea.sflag [#allocation5], 1
    %12 = vsyncpa %s11, 0
    loop: start=0, step=1, limit=4
    $region2: #{multi_head_attention.3} parent=1 // loop_pre_header
      _
    $region3: #{multi_head_attention.3} parent=1 // loop_header
      %s14 = sphi 0, %s18
      %p15 = scmp.ge.s32.totalorder %s14, 4
      %s21 = sphi 0, %s40
      %s22 = sphi 0, %s36
      %s23 = sphi 0, %s32
      %s24 = sphi 0, %s21
      %s25 = sphi 0, %s22
      %s26 = sphi 0, %s23
      %s27 = sphi 0, %s24
      %s28 = sphi 0, %s25
      %s29 = sphi 0, %s26
      %s45 = sphi 0, %s47
      %s48 = sphi 0, %s45
      %s49 = sphi 0, %s48
      %s65 = sphi 0, %s49
      %s73 = sphi 0, %s75
      %s76 = sphi 0, %s73
      %s77 = sphi 0, %s76
      %s93 = sphi 0, %s77
      %s101 = sphi 0, %s103
      %s104 = sphi 0, %s101
      %s105 = sphi 0, %s104
      %s121 = sphi 0, %s105
      %s125 = sphi 0, %s125
      %s127 = sphi 0, %s125
      %s128 = sphi 0, %s127
      %s142 = sphi 0, %s128
      %s146 = sphi 0, %s146
      %s148 = sphi 0, %s146
      %s149 = sphi 0, %s148
      %s163 = sphi 0, %s149
      %s171 = sphi 0, %s173
      %s174 = sphi 0, %s171
      %s175 = sphi 0, %s174
      %s191 = sphi 0, %s175
    $region4: #{multi_head_attention.3} parent=1 // loop_header_branch
      %17 = sbr.rel (%p15) target = $region8
    $region5: #{multi_head_attention.3} parent=1 // loop_body
      %s19 = ssub.s32 %s14, 1
      %s20 = ssub.s32 %s14, 2
      %s30 = sadd.s32 1, %s23
      %p31 = scmp.ge.s32.totalorder %s30, 1
      %s32 = scalar_select %p31, 0, %s30
      %s33 = sadd.s32 1, %s22
      %s34 = scalar_select %p31, %s33, %s22
      %p35 = scmp.ge.s32.totalorder %s34, 1
      %s36 = scalar_select %p35, 0, %s34
      %s37 = sadd.s32 1, %s21
      %s38 = scalar_select %p35, %s37, %s21
      %p39 = scmp.ge.s32.totalorder %s38, 2
      %s40 = scalar_select %p39, 0, %s38
      %s41 = ssub.s32 %s21, %s40
      %s42 = ssub.s32 %s22, %s36
      %s43 = sor.u32 %s41, %s42
      %p44 = scmp.eq.s32.totalorder %s43, 0
      %s46 = sadd.s32 %s45, 1
      %s47 = scalar_select %p44, %s45, %s46
      %p50 = pneg %p44
      %p51 = scmp.eq.s32.totalorder %s14, 1
      %p52 = por %p50, %p51
      %p53 = scmp.ne.s32.totalorder %s45, %s48
      %p54 = scmp.eq.s32.totalorder %s14, 0
      %p55 = por %p53, %p54
      %p56 = scmp.ne.s32.totalorder %s45, %s48
      %p57 = scmp.eq.s32.totalorder %s19, 1
      %p58 = por %p56, %p57
      %p59 = scmp.ne.s32.totalorder %s48, %s49
      %p60 = scmp.eq.s32.totalorder %s19, 0
      %p61 = por %p59, %p60
      %p62 = scmp.ne.s32.totalorder %s48, %s49
      %p63 = scmp.eq.s32.totalorder %s20, 1
      %p64 = por %p62, %p63
      %p66 = scmp.ne.s32.totalorder %s49, %s65
      %p67 = scmp.eq.s32.totalorder %s20, 0
      %p68 = por %p66, %p67
      %s69 = ssub.s32 %s21, %s40
      %s70 = ssub.s32 %s23, %s32
      %s71 = sor.u32 %s69, %s70
      %p72 = scmp.eq.s32.totalorder %s71, 0
      %s74 = sadd.s32 %s73, 1
      %s75 = scalar_select %p72, %s73, %s74
      %p78 = pneg %p72
      %p79 = scmp.eq.s32.totalorder %s14, 1
      %p80 = por %p78, %p79
      %p81 = scmp.ne.s32.totalorder %s73, %s76
      %p82 = scmp.eq.s32.totalorder %s14, 0
      %p83 = por %p81, %p82
      %p84 = scmp.ne.s32.totalorder %s73, %s76
      %p85 = scmp.eq.s32.totalorder %s19, 1
      %p86 = por %p84, %p85
      %p87 = scmp.ne.s32.totalorder %s76, %s77
      %p88 = scmp.eq.s32.totalorder %s19, 0
      %p89 = por %p87, %p88
      %p90 = scmp.ne.s32.totalorder %s76, %s77
      %p91 = scmp.eq.s32.totalorder %s20, 1
      %p92 = por %p90, %p91
      %p94 = scmp.ne.s32.totalorder %s77, %s93
      %p95 = scmp.eq.s32.totalorder %s20, 0
      %p96 = por %p94, %p95
      %s97 = ssub.s32 %s21, %s40
      %s98 = ssub.s32 %s23, %s32
      %s99 = sor.u32 %s97, %s98
      %p100 = scmp.eq.s32.totalorder %s99, 0
      %s102 = sadd.s32 %s101, 1
      %s103 = scalar_select %p100, %s101, %s102
      %p106 = pneg %p100
      %p107 = scmp.eq.s32.totalorder %s14, 1
      %p108 = por %p106, %p107
      %p109 = scmp.ne.s32.totalorder %s101, %s104
      %p110 = scmp.eq.s32.totalorder %s14, 0
      %p111 = por %p109, %p110
      %p112 = scmp.ne.s32.totalorder %s101, %s104
      %p113 = scmp.eq.s32.totalorder %s19, 1
      %p114 = por %p112, %p113
      %p115 = scmp.ne.s32.totalorder %s104, %s105
      %p116 = scmp.eq.s32.totalorder %s19, 0
      %p117 = por %p115, %p116
      %p118 = scmp.ne.s32.totalorder %s104, %s105
      %p119 = scmp.eq.s32.totalorder %s20, 1
      %p120 = por %p118, %p119
      %p122 = scmp.ne.s32.totalorder %s105, %s121
      %p123 = scmp.eq.s32.totalorder %s20, 0
      %p124 = por %p122, %p123
      %s126 = sadd.s32 %s125, 1
      %p129 = scmp.eq.s32.totalorder %s14, 1
      %p130 = scmp.ne.s32.totalorder %s125, %s127
      %p131 = scmp.eq.s32.totalorder %s14, 0
      %p132 = por %p130, %p131
      %p133 = scmp.ne.s32.totalorder %s125, %s127
      %p134 = scmp.eq.s32.totalorder %s19, 1
      %p135 = por %p133, %p134
      %p136 = scmp.ne.s32.totalorder %s127, %s128
      %p137 = scmp.eq.s32.totalorder %s19, 0
      %p138 = por %p136, %p137
      %p139 = scmp.ne.s32.totalorder %s127, %s128
      %p140 = scmp.eq.s32.totalorder %s20, 1
      %p141 = por %p139, %p140
      %p143 = scmp.ne.s32.totalorder %s128, %s142
      %p144 = scmp.eq.s32.totalorder %s20, 0
      %p145 = por %p143, %p144
      %s147 = sadd.s32 %s146, 1
      %p150 = scmp.eq.s32.totalorder %s14, 1
      %p151 = scmp.ne.s32.totalorder %s146, %s148
      %p152 = scmp.eq.s32.totalorder %s14, 0
      %p153 = por %p151, %p152
      %p154 = scmp.ne.s32.totalorder %s146, %s148
      %p155 = scmp.eq.s32.totalorder %s19, 1
      %p156 = por %p154, %p155
      %p157 = scmp.ne.s32.totalorder %s148, %s149
      %p158 = scmp.eq.s32.totalorder %s19, 0
      %p159 = por %p157, %p158
      %p160 = scmp.ne.s32.totalorder %s148, %s149
      %p161 = scmp.eq.s32.totalorder %s20, 1
      %p162 = por %p160, %p161
      %p164 = scmp.ne.s32.totalorder %s149, %s163
      %p165 = scmp.eq.s32.totalorder %s20, 0
      %p166 = por %p164, %p165
      %s167 = ssub.s32 %s21, %s40
      %s168 = ssub.s32 %s22, %s36
      %s169 = sor.u32 %s167, %s168
      %p170 = scmp.eq.s32.totalorder %s169, 0
      %s172 = sadd.s32 %s171, 1
      %s173 = scalar_select %p170, %s171, %s172
      %p176 = pneg %p170
      %p177 = scmp.eq.s32.totalorder %s14, 1
      %p178 = por %p176, %p177
      %p179 = scmp.ne.s32.totalorder %s171, %s174
      %p180 = scmp.eq.s32.totalorder %s14, 0
      %p181 = por %p179, %p180
      %p182 = scmp.ne.s32.totalorder %s171, %s174
      %p183 = scmp.eq.s32.totalorder %s19, 1
      %p184 = por %p182, %p183
      %p185 = scmp.ne.s32.totalorder %s174, %s175
      %p186 = scmp.eq.s32.totalorder %s19, 0
      %p187 = por %p185, %p186
      %p188 = scmp.ne.s32.totalorder %s174, %s175
      %p189 = scmp.eq.s32.totalorder %s20, 1
      %p190 = por %p188, %p189
      %p192 = scmp.ne.s32.totalorder %s175, %s191
      %p193 = scmp.eq.s32.totalorder %s20, 0
      %p194 = por %p192, %p193
      %p195 = scmp.le.s32.totalorder 1, %s14
      %p196 = scmp.lt.s32.totalorder %s14, 3
      %p197 = pnand %p195, %p196
      %p198 = pneg %p197
      // Predicated region
      $region9: #{multi_head_attention.3} parent=5 // pred_check
        _
      $region10: #{multi_head_attention.3} parent=5 // pred_check_branch
        %200 = sbr.rel (%p197) target = $region12
      $region11: #{multi_head_attention.3} parent=5 // pred_region
        %s201 = ssub.s32 %s14, 1
        // Predicated region
        $region13: #{multi_head_attention.3} parent=11 // pred_check
          %p202 = pneg %p138
        $region14: #{multi_head_attention.3} parent=11 // pred_check_branch
          %204 = sbr.rel (%p202) target = $region16
        $region15: #{multi_head_attention.3} parent=11 // pred_region
          _
        $region16: #{multi_head_attention.3} parent=11 // pred_fallthru
          _
        // Predicated region
        $region17: #{multi_head_attention.3} parent=11 // pred_check
          %p205 = pneg %p159
        $region18: #{multi_head_attention.3} parent=11 // pred_check_branch
          %207 = sbr.rel (%p205) target = $region20
        $region19: #{multi_head_attention.3} parent=11 // pred_region
          _
        $region20: #{multi_head_attention.3} parent=11 // pred_fallthru
          _
      $region12: #{multi_head_attention.3} parent=5 // pred_fallthru
        _
      %p208 = scmp.lt.s32.totalorder %s14, 2
      // Predicated region
      $region21: #{multi_head_attention.3} parent=5 // pred_check
        %p209 = pneg %p208
      $region22: #{multi_head_attention.3} parent=5 // pred_check_branch
        %211 = sbr.rel (%p209) target = $region24
      $region23: #{multi_head_attention.3} parent=5 // pred_region
        // Predicated region
        $region25: #{multi_head_attention.3} parent=23 // pred_check
          %p212 = pneg %p55
        $region26: #{multi_head_attention.3} parent=23 // pred_check_branch
          %214 = sbr.rel (%p212) target = $region28
        $region27: #{multi_head_attention.3} parent=23 // pred_region
          %p215 = scmp.lt.s32.totalorder %s21, 1
          %s216 = scalar_select %p215, %s21, 1
          %p217 = scmp.lt.s32.totalorder %s22, 0
          %s218 = scalar_select %p217, %s22, 0
          %s219 = sadd.s32 %s218, %s216
          %s220 = smul.addr %s219, 4
          %s221 = scalar_lea.vmem %s0, %s220
        $region28: #{multi_head_attention.3} parent=23 // pred_fallthru
          _
        // Predicated region
        $region29: #{multi_head_attention.3} parent=23 // pred_check
          %p222 = pneg %p83
        $region30: #{multi_head_attention.3} parent=23 // pred_check_branch
          %224 = sbr.rel (%p222) target = $region32
        $region31: #{multi_head_attention.3} parent=23 // pred_region
          %p225 = scmp.lt.s32.totalorder %s21, 1
          %s226 = scalar_select %p225, %s21, 1
          %p227 = scmp.lt.s32.totalorder %s23, 0
          %s228 = scalar_select %p227, %s23, 0
          %s229 = sadd.s32 %s228, %s226
          %s230 = smul.addr %s229, 4
          %s231 = scalar_lea.vmem %s1, %s230
        $region32: #{multi_head_attention.3} parent=23 // pred_fallthru
          _
        // Predicated region
        $region33: #{multi_head_attention.3} parent=23 // pred_check
          %p232 = pneg %p111
        $region34: #{multi_head_attention.3} parent=23 // pred_check_branch
          %234 = sbr.rel (%p232) target = $region36
        $region35: #{multi_head_attention.3} parent=23 // pred_region
          %p235 = scmp.lt.s32.totalorder %s21, 1
          %s236 = scalar_select %p235, %s21, 1
          %p237 = scmp.lt.s32.totalorder %s23, 0
          %s238 = scalar_select %p237, %s23, 0
          %s239 = sadd.s32 %s238, %s236
          %s240 = smul.addr %s239, 4
          %s241 = scalar_lea.vmem %s2, %s240
        $region36: #{multi_head_attention.3} parent=23 // pred_fallthru
          _
      $region24: #{multi_head_attention.3} parent=5 // pred_fallthru
        _
      %p242 = scmp.le.s32.totalorder 1, %s14
      %p243 = scmp.lt.s32.totalorder %s14, 3
      %p244 = pnand %p242, %p243
      %p245 = pneg %p244
      // Predicated region
      $region37: #{multi_head_attention.3} parent=5 // pred_check
        _
      $region38: #{multi_head_attention.3} parent=5 // pred_check_branch
        %247 = sbr.rel (%p244) target = $region40
      $region39: #{multi_head_attention.3} parent=5 // pred_region
        %s248 = ssub.s32 %s14, 1
        %p249 = scmp.lt.s32.totalorder %s24, 1
        %s250 = scalar_select %p249, %s24, 1
        %p251 = scmp.lt.s32.totalorder %s25, 0
        %s252 = scalar_select %p251, %s25, 0
        %s253 = sadd.s32 %s252, %s250
        %s254 = smul.addr %s253, 4
        %s255 = scalar_lea.vmem %s0, %s254
        %p256 = pneg %p61
        %p257 = pneg %p58
        %p258 = scmp.lt.s32.totalorder %s24, 1
        %s259 = scalar_select %p258, %s24, 1
        %p260 = scmp.lt.s32.totalorder %s26, 0
        %s261 = scalar_select %p260, %s26, 0
        %s262 = sadd.s32 %s261, %s259
        %s263 = smul.addr %s262, 4
        %s264 = scalar_lea.vmem %s1, %s263
        %p265 = pneg %p89
        %p266 = pneg %p86
        %p267 = scmp.lt.s32.totalorder %s24, 1
        %s268 = scalar_select %p267, %s24, 1
        %p269 = scmp.lt.s32.totalorder %s26, 0
        %s270 = scalar_select %p269, %s26, 0
        %s271 = sadd.s32 %s270, %s268
        %s272 = smul.addr %s271, 4
        %s273 = scalar_lea.vmem %s2, %s272
        %p274 = pneg %p117
        %p275 = pneg %p114
        %p276 = pneg %p138
        %p277 = pneg %p135
        %p278 = pneg %p159
        %p279 = pneg %p156
        %p280 = pneg %p187
        %p281 = pneg %p184
        %s282 = sand.u32 %s174, 1
        %s283 = scalar_lea.sflag [#allocation5], %s282
        %s284 = sand.u32 %s174, 1
        %s285 = smul.addr %s284, 4
        %s286 = scalar_lea.vmem [#allocation4], %s285
        %p287 = scmp.lt.s32.totalorder %s24, 1
        %s288 = scalar_select %p287, %s24, 1
        %p289 = scmp.lt.s32.totalorder %s25, 0
        %s290 = scalar_select %p289, %s25, 0
        %s291 = sadd.s32 %s290, %s288
        %s292 = smul.addr %s291, 4
        %s293 = scalar_lea.vmem %s0, %s292
        %p294 = scmp.lt.s32.totalorder %s24, 1
        %s295 = scalar_select %p294, %s24, 1
        %p296 = scmp.lt.s32.totalorder %s26, 0
        %s297 = scalar_select %p296, %s26, 0
        %s298 = sadd.s32 %s297, %s295
        %s299 = smul.addr %s298, 4
        %s300 = scalar_lea.vmem %s1, %s299
        %p301 = scmp.lt.s32.totalorder %s24, 1
        %s302 = scalar_select %p301, %s24, 1
        %p303 = scmp.lt.s32.totalorder %s26, 0
        %s304 = scalar_select %p303, %s26, 0
        %s305 = sadd.s32 %s304, %s302
        %s306 = smul.addr %s305, 4
        %s307 = scalar_lea.vmem %s2, %s306
        %p309 = scmp.eq.s32.totalorder %s26, 0
        // Predicated region
        $region41: #{multi_head_attention.3} parent=39 // pred_check
          %p310 = pneg %p309
        $region42: #{multi_head_attention.3} parent=39 // pred_check_branch
          %312 = sbr.rel (%p310) target = $region44
        $region43: #{multi_head_attention.3} parent=39 // pred_region
          %vm313 = vcmask 31744
          %v314 = vsel %vm313, -inf, 0.0
          %vm315 = vcmask 64512
          %316 = vst.msk [vmem:[#allocation2] sm:$0xff] %vm315, %v314
          %317 = vst [vmem:[#allocation3] sm:$0xff] 0.0
        $region44: #{multi_head_attention.3} parent=39 // pred_fallthru
          _
        %v318 = vld [vmem:[%s293] sm:$0xf]
        %v319 = vld [vmem:[%s300] sm:$0xf]
        %v320 = vld [vmem:[%s307] sm:$0xf]
        %v321 = vld [vmem:[#allocation2] sm:$0xff]
        %vm322 = vcmask 261120
        %v324 = vsel %vm322, %v318, 0
        %v327 = vsel %vm322, %v319, 0
        %329 = vmatprep.subr.bf16.mxu0 0
        %330 = vmatpush1.bf16.xpose.msra.mxu0 0
        %331 = vmatprep.subr.bf16.mxu0 0
        %332 = vmatpush1.bf16.xpose.msra.mxu0 0
        %333 = vmatprep.subr.bf16.mxu0 0
        %334 = vmatpush1.bf16.xpose.msra.mxu0 0
        %335 = vmatprep.subr.bf16.mxu0 0
        %336 = vmatpush1.bf16.xpose.msra.mxu0 0
        %337 = vmatprep.subr.bf16.mxu0 0
        %338 = vmatpush1.bf16.xpose.msra.mxu0 0
        %339 = vmatprep.subr.bf16.mxu0 0
        %340 = vmatpush1.bf16.xpose.msra.mxu0 0
        %341 = vmatprep.subr.bf16.mxu0 0
        %342 = vmatpush1.bf16.xpose.msra.mxu0 0
        %343 = vmatprep.subr.bf16.mxu0 0
        %344 = vmatpush1.bf16.xpose.msra.mxu0 %v327
        %345 = vmatprep.subr.bf16.mxu0 0
        %346 = vmatpush2.bf16.xpose.msra.mxu0 0
        %347 = vmatprep.subr.bf16.mxu0 0
        %348 = vmatpush2.bf16.xpose.msra.mxu0 0
        %349 = vmatprep.subr.bf16.mxu0 0
        %350 = vmatpush2.bf16.xpose.msra.mxu0 0
        %351 = vmatprep.subr.bf16.mxu0 0
        %352 = vmatpush2.bf16.xpose.msra.mxu0 0
        %353 = vmatprep.subr.bf16.mxu0 0
        %354 = vmatpush2.bf16.xpose.msra.mxu0 0
        %355 = vmatprep.subr.bf16.mxu0 0
        %356 = vmatpush2.bf16.xpose.msra.mxu0 0
        %357 = vmatprep.subr.bf16.mxu0 0
        %358 = vmatpush2.bf16.xpose.msra.mxu0 0
        %359 = vmatprep.subr.bf16.mxu0 0
        %360 = vmatpush2.bf16.xpose.msra.mxu0 0
        %361 = vmatprep.mubr.bf16.mxu0 0
        %362 = vmatmul.mubr.bf16.gmra.mxu0 %v324
        %v363 = vpop.f32.mrf.mxu0
        %v364 = vadd.f32 0.0, %v363
        %v365 = vpop.f32.mrf.mxu0
        %v366 = vpop.f32.mrf.mxu0
        %v367 = vpop.f32.mrf.mxu0
        %368 = vdwg.mxu0
        %vm369 = vcmask 64512
        %v370 = vsel %vm369, %v364, -inf
        %371 = vmax.xlane.f32.xlu0 %v370
        %v372 = vpop.xlane.xlu0 %371
        %v373 = vmax.f32 %v321, %v372
        %v374 = vsub.f32 %v321, %v373
        %v375 = vmul.f32 %v374, 1.442695
        %v376 = vpow.pop %v375
        %378 = vset.pattern.permute.xlu0 0
        %379 = vperm.xlu0 %378, %v373
        %v380 = vpop.permute.xlu0 %379
        %v382 = vsub.f32 %v364, %v380
        %v383 = vpack.c.bf16 %v382, %v382
        %v385 = vmul.bf16 %v383, 1069105081
        %v386 = vpow.bf16.pop %v385
        %v387 = vunpack.c.l.bf16 %v386
        %v388 = vsel %vm369, %v387, 0.0
        %389 = vadd.xlane.f32.xlu0 %v388
        %v390 = vpop.xlane.xlu0 %389
        %392 = vrot.lane.b32.xlu0 %v321, 124
        %v393 = vpop.permute.xlu0 %392
        %v395 = vmul.f32 %v376, %v393
        %v396 = vadd.f32 %v395, %v390
        %398 = vset.pattern.permute.xlu0 0
        %399 = vperm.xlu0 %398, %v376
        %v400 = vpop.permute.xlu0 %399
        %v403 = vsel %vm369, %v386, 0
        %vm405 = vcmask 1043456
        %v407 = vsel %vm405, %v320, 0
        %409 = vmatprep.subr.bf16.mxu0 0
        %410 = vmatpush1.bf16.msra.mxu0 0
        %411 = vmatprep.subr.bf16.mxu0 0
        %412 = vmatpush1.bf16.msra.mxu0 0
        %413 = vmatprep.subr.bf16.mxu0 0
        %414 = vmatpush1.bf16.msra.mxu0 0
        %415 = vmatprep.subr.bf16.mxu0 0
        %416 = vmatpush1.bf16.msra.mxu0 0
        %417 = vmatprep.subr.bf16.mxu0 0
        %418 = vmatpush1.bf16.msra.mxu0 0
        %419 = vmatprep.subr.bf16.mxu0 0
        %420 = vmatpush1.bf16.msra.mxu0 0
        %421 = vmatprep.subr.bf16.mxu0 0
        %422 = vmatpush1.bf16.msra.mxu0 0
        %423 = vmatprep.subr.bf16.mxu0 0
        %424 = vmatpush1.bf16.msra.mxu0 %v407
        %425 = vmatprep.subr.bf16.mxu0 0
        %426 = vmatpush2.bf16.msra.mxu0 0
        %427 = vmatprep.subr.bf16.mxu0 0
        %428 = vmatpush2.bf16.msra.mxu0 0
        %429 = vmatprep.subr.bf16.mxu0 0
        %430 = vmatpush2.bf16.msra.mxu0 0
        %431 = vmatprep.subr.bf16.mxu0 0
        %432 = vmatpush2.bf16.msra.mxu0 0
        %433 = vmatprep.subr.bf16.mxu0 0
        %434 = vmatpush2.bf16.msra.mxu0 0
        %435 = vmatprep.subr.bf16.mxu0 0
        %436 = vmatpush2.bf16.msra.mxu0 0
        %437 = vmatprep.subr.bf16.mxu0 0
        %438 = vmatpush2.bf16.msra.mxu0 0
        %439 = vmatprep.subr.bf16.mxu0 0
        %440 = vmatpush2.bf16.msra.mxu0 0
        %441 = vmatprep.mubr.bf16.mxu0 0
        %442 = vmatmul.mubr.bf16.gmra.mxu0 %v403
        %v443 = vpop.f32.mrf.mxu0
        %v444 = vadd.f32 0.0, %v443
        %v445 = vpop.f32.mrf.mxu0
        %v446 = vpop.f32.mrf.mxu0
        %v447 = vpop.f32.mrf.mxu0
        %448 = vdwg.mxu0
        %v450 = vunpack.c.l.b16 %v318
        %v451 = vpack.c.b16 %v450, %v450
        %452 = vrot.lane.b32.xlu0 %v451, 96
        %v453 = vpop.permute.xlu0 %452
        %v455 = vunpack.c.l.b16 %v319
        %v456 = vpack.c.b16 %v455, %v455
        %457 = vrot.lane.b32.xlu0 %v456, 96
        %v458 = vpop.permute.xlu0 %457
        %v460 = vsel %vm322, %v453, 0
        %v463 = vsel %vm322, %v458, 0
        %465 = vmatprep.subr.bf16.mxu0 0
        %466 = vmatpush1.bf16.xpose.msra.mxu0 0
        %467 = vmatprep.subr.bf16.mxu0 0
        %468 = vmatpush1.bf16.xpose.msra.mxu0 0
        %469 = vmatprep.subr.bf16.mxu0 0
        %470 = vmatpush1.bf16.xpose.msra.mxu0 0
        %471 = vmatprep.subr.bf16.mxu0 0
        %472 = vmatpush1.bf16.xpose.msra.mxu0 0
        %473 = vmatprep.subr.bf16.mxu0 0
        %474 = vmatpush1.bf16.xpose.msra.mxu0 0
        %475 = vmatprep.subr.bf16.mxu0 0
        %476 = vmatpush1.bf16.xpose.msra.mxu0 0
        %477 = vmatprep.subr.bf16.mxu0 0
        %478 = vmatpush1.bf16.xpose.msra.mxu0 0
        %479 = vmatprep.subr.bf16.mxu0 0
        %480 = vmatpush1.bf16.xpose.msra.mxu0 %v463
        %481 = vmatprep.subr.bf16.mxu0 0
        %482 = vmatpush2.bf16.xpose.msra.mxu0 0
        %483 = vmatprep.subr.bf16.mxu0 0
        %484 = vmatpush2.bf16.xpose.msra.mxu0 0
        %485 = vmatprep.subr.bf16.mxu0 0
        %486 = vmatpush2.bf16.xpose.msra.mxu0 0
        %487 = vmatprep.subr.bf16.mxu0 0
        %488 = vmatpush2.bf16.xpose.msra.mxu0 0
        %489 = vmatprep.subr.bf16.mxu0 0
        %490 = vmatpush2.bf16.xpose.msra.mxu0 0
        %491 = vmatprep.subr.bf16.mxu0 0
        %492 = vmatpush2.bf16.xpose.msra.mxu0 0
        %493 = vmatprep.subr.bf16.mxu0 0
        %494 = vmatpush2.bf16.xpose.msra.mxu0 0
        %495 = vmatprep.subr.bf16.mxu0 0
        %496 = vmatpush2.bf16.xpose.msra.mxu0 0
        %497 = vmatprep.mubr.bf16.mxu0 0
        %498 = vmatmul.mubr.bf16.gmra.mxu0 %v460
        %v499 = vpop.f32.mrf.mxu0
        %v500 = vadd.f32 0.0, %v499
        %v501 = vpop.f32.mrf.mxu0
        %v502 = vpop.f32.mrf.mxu0
        %v503 = vpop.f32.mrf.mxu0
        %504 = vdwg.mxu0
        %v505 = vsel %vm369, %v500, -inf
        %506 = vmax.xlane.f32.xlu0 %v505
        %v507 = vpop.xlane.xlu0 %506
        %v508 = vmax.f32 %v321, %v507
        %v509 = vsub.f32 %v321, %v508
        %v510 = vmul.f32 %v509, 1.442695
        %v511 = vpow.pop %v510
        %513 = vset.pattern.permute.xlu0 1
        %514 = vperm.xlu0 %513, %v508
        %v515 = vpop.permute.xlu0 %514
        %v517 = vsub.f32 %v500, %v515
        %v518 = vpack.c.bf16 %v517, %v517
        %v520 = vmul.bf16 %v518, 1069105081
        %v521 = vpow.bf16.pop %v520
        %v522 = vunpack.c.l.bf16 %v521
        %v523 = vsel %vm369, %v522, 0.0
        %524 = vadd.xlane.f32.xlu0 %v523
        %v525 = vpop.xlane.xlu0 %524
        %v526 = vmul.f32 %v511, %v393
        %v527 = vadd.f32 %v526, %v525
        %529 = vset.pattern.permute.xlu0 1
        %530 = vperm.xlu0 %529, %v511
        %v531 = vpop.permute.xlu0 %530
        %v534 = vunpack.c.l.b16 %v320
        %v535 = vpack.c.b16 %v534, %v534
        %536 = vrot.lane.b32.xlu0 %v535, 96
        %v537 = vpop.permute.xlu0 %536
        %v539 = vsel %vm369, %v521, 0
        %v542 = vsel %vm405, %v537, 0
        %544 = vmatprep.subr.bf16.mxu0 0
        %545 = vmatpush1.bf16.msra.mxu0 0
        %546 = vmatprep.subr.bf16.mxu0 0
        %547 = vmatpush1.bf16.msra.mxu0 0
        %548 = vmatprep.subr.bf16.mxu0 0
        %549 = vmatpush1.bf16.msra.mxu0 0
        %550 = vmatprep.subr.bf16.mxu0 0
        %551 = vmatpush1.bf16.msra.mxu0 0
        %552 = vmatprep.subr.bf16.mxu0 0
        %553 = vmatpush1.bf16.msra.mxu0 0
        %554 = vmatprep.subr.bf16.mxu0 0
        %555 = vmatpush1.bf16.msra.mxu0 0
        %556 = vmatprep.subr.bf16.mxu0 0
        %557 = vmatpush1.bf16.msra.mxu0 0
        %558 = vmatprep.subr.bf16.mxu0 0
        %559 = vmatpush1.bf16.msra.mxu0 %v542
        %560 = vmatprep.subr.bf16.mxu0 0
        %561 = vmatpush2.bf16.msra.mxu0 0
        %562 = vmatprep.subr.bf16.mxu0 0
        %563 = vmatpush2.bf16.msra.mxu0 0
        %564 = vmatprep.subr.bf16.mxu0 0
        %565 = vmatpush2.bf16.msra.mxu0 0
        %566 = vmatprep.subr.bf16.mxu0 0
        %567 = vmatpush2.bf16.msra.mxu0 0
        %568 = vmatprep.subr.bf16.mxu0 0
        %569 = vmatpush2.bf16.msra.mxu0 0
        %570 = vmatprep.subr.bf16.mxu0 0
        %571 = vmatpush2.bf16.msra.mxu0 0
        %572 = vmatprep.subr.bf16.mxu0 0
        %573 = vmatpush2.bf16.msra.mxu0 0
        %574 = vmatprep.subr.bf16.mxu0 0
        %575 = vmatpush2.bf16.msra.mxu0 0
        %576 = vmatprep.mubr.bf16.mxu0 0
        %577 = vmatmul.mubr.bf16.gmra.mxu0 %v539
        %v578 = vpop.f32.mrf.mxu0
        %v579 = vadd.f32 0.0, %v578
        %v580 = vpop.f32.mrf.mxu0
        %v581 = vpop.f32.mrf.mxu0
        %v582 = vpop.f32.mrf.mxu0
        %583 = vdwg.mxu0
        %584 = vrot.lane.b32.xlu0 %v451, 64
        %v585 = vpop.permute.xlu0 %584
        %586 = vrot.lane.b32.xlu0 %v456, 64
        %v587 = vpop.permute.xlu0 %586
        %v589 = vsel %vm322, %v585, 0
        %v592 = vsel %vm322, %v587, 0
        %594 = vmatprep.subr.bf16.mxu0 0
        %595 = vmatpush1.bf16.xpose.msra.mxu0 0
        %596 = vmatprep.subr.bf16.mxu0 0
        %597 = vmatpush1.bf16.xpose.msra.mxu0 0
        %598 = vmatprep.subr.bf16.mxu0 0
        %599 = vmatpush1.bf16.xpose.msra.mxu0 0
        %600 = vmatprep.subr.bf16.mxu0 0
        %601 = vmatpush1.bf16.xpose.msra.mxu0 0
        %602 = vmatprep.subr.bf16.mxu0 0
        %603 = vmatpush1.bf16.xpose.msra.mxu0 0
        %604 = vmatprep.subr.bf16.mxu0 0
        %605 = vmatpush1.bf16.xpose.msra.mxu0 0
        %606 = vmatprep.subr.bf16.mxu0 0
        %607 = vmatpush1.bf16.xpose.msra.mxu0 0
        %608 = vmatprep.subr.bf16.mxu0 0
        %609 = vmatpush1.bf16.xpose.msra.mxu0 %v592
        %610 = vmatprep.subr.bf16.mxu0 0
        %611 = vmatpush2.bf16.xpose.msra.mxu0 0
        %612 = vmatprep.subr.bf16.mxu0 0
        %613 = vmatpush2.bf16.xpose.msra.mxu0 0
        %614 = vmatprep.subr.bf16.mxu0 0
        %615 = vmatpush2.bf16.xpose.msra.mxu0 0
        %616 = vmatprep.subr.bf16.mxu0 0
        %617 = vmatpush2.bf16.xpose.msra.mxu0 0
        %618 = vmatprep.subr.bf16.mxu0 0
        %619 = vmatpush2.bf16.xpose.msra.mxu0 0
        %620 = vmatprep.subr.bf16.mxu0 0
        %621 = vmatpush2.bf16.xpose.msra.mxu0 0
        %622 = vmatprep.subr.bf16.mxu0 0
        %623 = vmatpush2.bf16.xpose.msra.mxu0 0
        %624 = vmatprep.subr.bf16.mxu0 0
        %625 = vmatpush2.bf16.xpose.msra.mxu0 0
        %626 = vmatprep.mubr.bf16.mxu0 0
        %627 = vmatmul.mubr.bf16.gmra.mxu0 %v589
        %v628 = vpop.f32.mrf.mxu0
        %v629 = vadd.f32 0.0, %v628
        %v630 = vpop.f32.mrf.mxu0
        %v631 = vpop.f32.mrf.mxu0
        %v632 = vpop.f32.mrf.mxu0
        %633 = vdwg.mxu0
        %v634 = vsel %vm369, %v629, -inf
        %635 = vmax.xlane.f32.xlu0 %v634
        %v636 = vpop.xlane.xlu0 %635
        %v637 = vmax.f32 %v321, %v636
        %v638 = vsub.f32 %v321, %v637
        %v639 = vmul.f32 %v638, 1.442695
        %v640 = vpow.pop %v639
        %642 = vset.pattern.permute.xlu0 2
        %643 = vperm.xlu0 %642, %v637
        %v644 = vpop.permute.xlu0 %643
        %v646 = vsub.f32 %v629, %v644
        %v647 = vpack.c.bf16 %v646, %v646
        %v649 = vmul.bf16 %v647, 1069105081
        %v650 = vpow.bf16.pop %v649
        %v651 = vunpack.c.l.bf16 %v650
        %v652 = vsel %vm369, %v651, 0.0
        %653 = vadd.xlane.f32.xlu0 %v652
        %v654 = vpop.xlane.xlu0 %653
        %v655 = vmul.f32 %v640, %v393
        %v656 = vadd.f32 %v655, %v654
        %658 = vset.pattern.permute.xlu0 2
        %659 = vperm.xlu0 %658, %v640
        %v660 = vpop.permute.xlu0 %659
        %662 = vrot.lane.b32.xlu0 %v535, 64
        %v663 = vpop.permute.xlu0 %662
        %v665 = vsel %vm369, %v650, 0
        %v668 = vsel %vm405, %v663, 0
        %670 = vmatprep.subr.bf16.mxu0 0
        %671 = vmatpush1.bf16.msra.mxu0 0
        %672 = vmatprep.subr.bf16.mxu0 0
        %673 = vmatpush1.bf16.msra.mxu0 0
        %674 = vmatprep.subr.bf16.mxu0 0
        %675 = vmatpush1.bf16.msra.mxu0 0
        %676 = vmatprep.subr.bf16.mxu0 0
        %677 = vmatpush1.bf16.msra.mxu0 0
        %678 = vmatprep.subr.bf16.mxu0 0
        %679 = vmatpush1.bf16.msra.mxu0 0
        %680 = vmatprep.subr.bf16.mxu0 0
        %681 = vmatpush1.bf16.msra.mxu0 0
        %682 = vmatprep.subr.bf16.mxu0 0
        %683 = vmatpush1.bf16.msra.mxu0 0
        %684 = vmatprep.subr.bf16.mxu0 0
        %685 = vmatpush1.bf16.msra.mxu0 %v668
        %686 = vmatprep.subr.bf16.mxu0 0
        %687 = vmatpush2.bf16.msra.mxu0 0
        %688 = vmatprep.subr.bf16.mxu0 0
        %689 = vmatpush2.bf16.msra.mxu0 0
        %690 = vmatprep.subr.bf16.mxu0 0
        %691 = vmatpush2.bf16.msra.mxu0 0
        %692 = vmatprep.subr.bf16.mxu0 0
        %693 = vmatpush2.bf16.msra.mxu0 0
        %694 = vmatprep.subr.bf16.mxu0 0
        %695 = vmatpush2.bf16.msra.mxu0 0
        %696 = vmatprep.subr.bf16.mxu0 0
        %697 = vmatpush2.bf16.msra.mxu0 0
        %698 = vmatprep.subr.bf16.mxu0 0
        %699 = vmatpush2.bf16.msra.mxu0 0
        %700 = vmatprep.subr.bf16.mxu0 0
        %701 = vmatpush2.bf16.msra.mxu0 0
        %702 = vmatprep.mubr.bf16.mxu0 0
        %703 = vmatmul.mubr.bf16.gmra.mxu0 %v665
        %v704 = vpop.f32.mrf.mxu0
        %v705 = vadd.f32 0.0, %v704
        %v706 = vpop.f32.mrf.mxu0
        %v707 = vpop.f32.mrf.mxu0
        %v708 = vpop.f32.mrf.mxu0
        %709 = vdwg.mxu0
        %710 = vrot.lane.b32.xlu0 %v451, 32
        %v711 = vpop.permute.xlu0 %710
        %712 = vrot.lane.b32.xlu0 %v456, 32
        %v713 = vpop.permute.xlu0 %712
        %v715 = vsel %vm322, %v711, 0
        %v718 = vsel %vm322, %v713, 0
        %720 = vmatprep.subr.bf16.mxu0 0
        %721 = vmatpush1.bf16.xpose.msra.mxu0 0
        %722 = vmatprep.subr.bf16.mxu0 0
        %723 = vmatpush1.bf16.xpose.msra.mxu0 0
        %724 = vmatprep.subr.bf16.mxu0 0
        %725 = vmatpush1.bf16.xpose.msra.mxu0 0
        %726 = vmatprep.subr.bf16.mxu0 0
        %727 = vmatpush1.bf16.xpose.msra.mxu0 0
        %728 = vmatprep.subr.bf16.mxu0 0
        %729 = vmatpush1.bf16.xpose.msra.mxu0 0
        %730 = vmatprep.subr.bf16.mxu0 0
        %731 = vmatpush1.bf16.xpose.msra.mxu0 0
        %732 = vmatprep.subr.bf16.mxu0 0
        %733 = vmatpush1.bf16.xpose.msra.mxu0 0
        %734 = vmatprep.subr.bf16.mxu0 0
        %735 = vmatpush1.bf16.xpose.msra.mxu0 %v718
        %736 = vmatprep.subr.bf16.mxu0 0
        %737 = vmatpush2.bf16.xpose.msra.mxu0 0
        %738 = vmatprep.subr.bf16.mxu0 0
        %739 = vmatpush2.bf16.xpose.msra.mxu0 0
        %740 = vmatprep.subr.bf16.mxu0 0
        %741 = vmatpush2.bf16.xpose.msra.mxu0 0
        %742 = vmatprep.subr.bf16.mxu0 0
        %743 = vmatpush2.bf16.xpose.msra.mxu0 0
        %744 = vmatprep.subr.bf16.mxu0 0
        %745 = vmatpush2.bf16.xpose.msra.mxu0 0
        %746 = vmatprep.subr.bf16.mxu0 0
        %747 = vmatpush2.bf16.xpose.msra.mxu0 0
        %748 = vmatprep.subr.bf16.mxu0 0
        %749 = vmatpush2.bf16.xpose.msra.mxu0 0
        %750 = vmatprep.subr.bf16.mxu0 0
        %751 = vmatpush2.bf16.xpose.msra.mxu0 0
        %752 = vmatprep.mubr.bf16.mxu0 0
        %753 = vmatmul.mubr.bf16.gmra.mxu0 %v715
        %v754 = vpop.f32.mrf.mxu0
        %v755 = vadd.f32 0.0, %v754
        %v756 = vpop.f32.mrf.mxu0
        %v757 = vpop.f32.mrf.mxu0
        %v758 = vpop.f32.mrf.mxu0
        %759 = vdwg.mxu0
        %v760 = vsel %vm369, %v755, -inf
        %761 = vmax.xlane.f32.xlu0 %v760
        %v762 = vpop.xlane.xlu0 %761
        %v763 = vmax.f32 %v321, %v762
        %v764 = vsub.f32 %v321, %v763
        %v765 = vmul.f32 %v764, 1.442695
        %v766 = vpow.pop %v765
        %768 = vset.pattern.permute.xlu0 3
        %769 = vperm.xlu0 %768, %v763
        %v770 = vpop.permute.xlu0 %769
        %v772 = vsub.f32 %v755, %v770
        %v773 = vpack.c.bf16 %v772, %v772
        %v775 = vmul.bf16 %v773, 1069105081
        %v776 = vpow.bf16.pop %v775
        %v777 = vunpack.c.l.bf16 %v776
        %v778 = vsel %vm369, %v777, 0.0
        %779 = vadd.xlane.f32.xlu0 %v778
        %v780 = vpop.xlane.xlu0 %779
        %v781 = vmul.f32 %v766, %v393
        %v782 = vadd.f32 %v781, %v780
        %784 = vset.pattern.permute.xlu0 3
        %785 = vperm.xlu0 %784, %v766
        %v786 = vpop.permute.xlu0 %785
        %788 = vrot.lane.b32.xlu0 %v535, 32
        %v789 = vpop.permute.xlu0 %788
        %v791 = vsel %vm369, %v776, 0
        %v794 = vsel %vm405, %v789, 0
        %796 = vmatprep.subr.bf16.mxu0 0
        %797 = vmatpush1.bf16.msra.mxu0 0
        %798 = vmatprep.subr.bf16.mxu0 0
        %799 = vmatpush1.bf16.msra.mxu0 0
        %800 = vmatprep.subr.bf16.mxu0 0
        %801 = vmatpush1.bf16.msra.mxu0 0
        %802 = vmatprep.subr.bf16.mxu0 0
        %803 = vmatpush1.bf16.msra.mxu0 0
        %804 = vmatprep.subr.bf16.mxu0 0
        %805 = vmatpush1.bf16.msra.mxu0 0
        %806 = vmatprep.subr.bf16.mxu0 0
        %807 = vmatpush1.bf16.msra.mxu0 0
        %808 = vmatprep.subr.bf16.mxu0 0
        %809 = vmatpush1.bf16.msra.mxu0 0
        %810 = vmatprep.subr.bf16.mxu0 0
        %811 = vmatpush1.bf16.msra.mxu0 %v794
        %812 = vmatprep.subr.bf16.mxu0 0
        %813 = vmatpush2.bf16.msra.mxu0 0
        %814 = vmatprep.subr.bf16.mxu0 0
        %815 = vmatpush2.bf16.msra.mxu0 0
        %816 = vmatprep.subr.bf16.mxu0 0
        %817 = vmatpush2.bf16.msra.mxu0 0
        %818 = vmatprep.subr.bf16.mxu0 0
        %819 = vmatpush2.bf16.msra.mxu0 0
        %820 = vmatprep.subr.bf16.mxu0 0
        %821 = vmatpush2.bf16.msra.mxu0 0
        %822 = vmatprep.subr.bf16.mxu0 0
        %823 = vmatpush2.bf16.msra.mxu0 0
        %824 = vmatprep.subr.bf16.mxu0 0
        %825 = vmatpush2.bf16.msra.mxu0 0
        %826 = vmatprep.subr.bf16.mxu0 0
        %827 = vmatpush2.bf16.msra.mxu0 0
        %828 = vmatprep.mubr.bf16.mxu0 0
        %829 = vmatmul.mubr.bf16.gmra.mxu0 %v791
        %v830 = vpop.f32.mrf.mxu0
        %v831 = vadd.f32 0.0, %v830
        %v832 = vpop.f32.mrf.mxu0
        %v833 = vpop.f32.mrf.mxu0
        %v834 = vpop.f32.mrf.mxu0
        %835 = vdwg.mxu0
        %837 = vrot.lane.b32.xlu0 %v396, 4
        %v838 = vpop.permute.xlu0 %837
        %841 = vrot.lane.b32.xlu0 %v527, 4
        %v842 = vpop.permute.xlu0 %841
        %845 = vrot.lane.b32.xlu0 %v656, 4
        %v846 = vpop.permute.xlu0 %845
        %849 = vrot.lane.b32.xlu0 %v782, 4
        %v850 = vpop.permute.xlu0 %849
        %vm852 = vcmask 7168
        %v853 = vsel %vm852, %v373, %v508
        %vm854 = vcmask 15360
        %v855 = vsel %vm854, %v853, %v637
        %vm856 = vcmask 23552
        %v857 = vsel %vm856, %v855, %v763
        %vm858 = vcmask 31744
        %v859 = vsel %vm858, %v857, %v838
        %vm860 = vcmask 39936
        %v861 = vsel %vm860, %v859, %v842
        %vm862 = vcmask 48128
        %v863 = vsel %vm862, %v861, %v846
        %vm864 = vcmask 56320
        %v865 = vsel %vm864, %v863, %v850
        %866 = vst.msk [vmem:[#allocation2] sm:$0xff] %vm369, %v865
        %v867 = vsel %vm322, %v400, %v531
        %vm868 = vcmask 523264
        %v869 = vsel %vm868, %v867, %v660
        %vm870 = vcmask 785408
        %v871 = vsel %vm870, %v869, %v786
        %v872 = vld [vmem:[#allocation3] sm:$0xff]
        %v873 = vmul.f32 %v871, %v872
        %875 = vrot.lane.b32.xlu0 %v579, 32
        %v876 = vpop.permute.xlu0 %875
        %879 = vrot.lane.b32.xlu0 %v705, 64
        %v880 = vpop.permute.xlu0 %879
        %883 = vrot.lane.b32.xlu0 %v831, 96
        %v884 = vpop.permute.xlu0 %883
        %v886 = vsel %vm322, %v444, %v876
        %v887 = vsel %vm868, %v886, %v880
        %v888 = vsel %vm870, %v887, %v884
        %v889 = vadd.f32 %v873, %v888
        %890 = vst [vmem:[#allocation3] sm:$0xff] %v889
        // Predicated region
        $region45: #{multi_head_attention.3} parent=39 // pred_check
          %p891 = pneg %p309
        $region46: #{multi_head_attention.3} parent=39 // pred_check_branch
          %893 = sbr.rel (%p891) target = $region48
        $region47: #{multi_head_attention.3} parent=39 // pred_region
          %v894 = vld [vmem:[#allocation2] sm:$0xff]
          %v895 = vrcp.pop %v894
          %897 = vset.pattern.permute.xlu0 4
          %898 = vperm.xlu0 %897, %v895
          %v899 = vpop.permute.xlu0 %898
          %901 = vset.pattern.permute.xlu0 5
          %902 = vperm.xlu0 %901, %v895
          %v903 = vpop.permute.xlu0 %902
          %905 = vset.pattern.permute.xlu0 6
          %906 = vperm.xlu0 %905, %v895
          %v907 = vpop.permute.xlu0 %906
          %909 = vset.pattern.permute.xlu0 7
          %910 = vperm.xlu0 %909, %v895
          %v911 = vpop.permute.xlu0 %910
          %v913 = vld [vmem:[#allocation3] sm:$0xff]
          %v914 = vsel %vm322, %v899, %v903
          %v915 = vsel %vm868, %v914, %v907
          %v916 = vsel %vm870, %v915, %v911
          %v917 = vmul.f32 %v913, %v916
          %v918 = vpack.c.bf16 %v917, %v917
          %v919 = vld [vmem:[%s3] sm:$0xf]
          %v920 = vld [vmem:[%s3 + $0x4] sm:$0xf]
          %v921 = vld [vmem:[%s3 + $0x8] sm:$0xf]
          %v922 = vld [vmem:[%s3 + $0xc] sm:$0xf]
          %v923 = vld [vmem:[%s3 + $0x10] sm:$0xf]
          %v924 = vld [vmem:[%s3 + $0x14] sm:$0xf]
          %v925 = vld [vmem:[%s3 + $0x18] sm:$0xf]
          %v926 = vld [vmem:[%s3 + $0x1c] sm:$0xf]
          %v927 = vld [vmem:[%s3 + $0x20] sm:$0xf]
          %v928 = vld [vmem:[%s3 + $0x24] sm:$0xf]
          %v929 = vld [vmem:[%s3 + $0x28] sm:$0xf]
          %v930 = vld [vmem:[%s3 + $0x2c] sm:$0xf]
          %v931 = vld [vmem:[%s3 + $0x30] sm:$0xf]
          %v932 = vld [vmem:[%s3 + $0x34] sm:$0xf]
          %v933 = vld [vmem:[%s3 + $0x38] sm:$0xf]
          %v934 = vld [vmem:[%s3 + $0x3c] sm:$0xf]
          %v935 = vld [vmem:[%s4] sm:$0x1]
          %v937 = vlaneseq
          %v938 = vshrl.u32 %v937, 7
          %v939 = vsub.s32 0, %v938
          %v940 = vrot.slane %v935, %v939
          %v958 = vunpack.c.l.b16 %v919
          %v959 = vunpack.c.l.b16 %v920
          %v960 = vunpack.c.l.b16 %v921
          %v961 = vunpack.c.l.b16 %v922
          %v962 = vunpack.c.l.b16 %v923
          %v963 = vunpack.c.l.b16 %v924
          %v964 = vunpack.c.l.b16 %v925
          %v965 = vunpack.c.l.b16 %v926
          %v966 = vunpack.c.l.b16 %v927
          %v967 = vunpack.c.l.b16 %v928
          %v968 = vunpack.c.l.b16 %v929
          %v969 = vunpack.c.l.b16 %v930
          %v970 = vunpack.c.l.b16 %v931
          %v971 = vunpack.c.l.b16 %v932
          %v972 = vunpack.c.l.b16 %v933
          %v973 = vunpack.c.l.b16 %v934
          %v974 = vpack.c.b16 %v959, %v958
          %v975 = vpack.c.b16 %v961, %v960
          %v976 = vpack.c.b16 %v963, %v962
          %v977 = vpack.c.b16 %v965, %v964
          %v978 = vpack.c.b16 %v967, %v966
          %v979 = vpack.c.b16 %v969, %v968
          %v980 = vpack.c.b16 %v971, %v970
          %v981 = vpack.c.b16 %v973, %v972
          %990 = vmatprep.subr.bf16.mxu0 0
          %991 = vmatpush1.bf16.msra.mxu0 %v981
          %992 = vmatprep.subr.bf16.mxu0 0
          %993 = vmatpush1.bf16.msra.mxu0 %v980
          %994 = vmatprep.subr.bf16.mxu0 0
          %995 = vmatpush1.bf16.msra.mxu0 %v979
          %996 = vmatprep.subr.bf16.mxu0 0
          %997 = vmatpush1.bf16.msra.mxu0 %v978
          %998 = vmatprep.subr.bf16.mxu0 0
          %999 = vmatpush1.bf16.msra.mxu0 %v977
          %1000 = vmatprep.subr.bf16.mxu0 0
          %1001 = vmatpush1.bf16.msra.mxu0 %v976
          %1002 = vmatprep.subr.bf16.mxu0 0
          %1003 = vmatpush1.bf16.msra.mxu0 %v975
          %1004 = vmatprep.subr.bf16.mxu0 0
          %1005 = vmatpush1.bf16.msra.mxu0 %v974
          %1006 = vmatprep.subr.bf16.mxu0 0
          %1007 = vmatpush2.bf16.msra.mxu0 0
          %1008 = vmatprep.subr.bf16.mxu0 0
          %1009 = vmatpush2.bf16.msra.mxu0 0
          %1010 = vmatprep.subr.bf16.mxu0 0
          %1011 = vmatpush2.bf16.msra.mxu0 0
          %1012 = vmatprep.subr.bf16.mxu0 0
          %1013 = vmatpush2.bf16.msra.mxu0 0
          %1014 = vmatprep.subr.bf16.mxu0 0
          %1015 = vmatpush2.bf16.msra.mxu0 0
          %1016 = vmatprep.subr.bf16.mxu0 0
          %1017 = vmatpush2.bf16.msra.mxu0 0
          %1018 = vmatprep.subr.bf16.mxu0 0
          %1019 = vmatpush2.bf16.msra.mxu0 0
          %1020 = vmatprep.subr.bf16.mxu0 0
          %1021 = vmatpush2.bf16.msra.mxu0 0
          %1022 = vmatprep.mubr.bf16.mxu0 0
          %1023 = vmatmul.mubr.bf16.gmra.mxu0 %v918
          %v1024 = vpop.f32.mrf.mxu0
          %v1025 = vadd.f32 %v940, %v1024
          %v1026 = vpop.f32.mrf.mxu0
          %v1027 = vpop.f32.mrf.mxu0
          %v1028 = vpop.f32.mrf.mxu0
          %1029 = vdwg.mxu0
          %v1030 = vpack.c.bf16 %v1025, %v1025
          %1031 = vst [vmem:[%s286] sm:$0xf] %v1030
        $region48: #{multi_head_attention.3} parent=39 // pred_fallthru
          _
        %s1032 = sand.u32 %s174, 1
        %s1033 = scalar_lea.sflag [#allocation5], %s1032
        %s1034 = sand.u32 %s174, 1
        %s1035 = smul.addr %s1034, 4
        %s1036 = scalar_lea.vmem [#allocation4], %s1035
        // Predicated region
        $region49: #{multi_head_attention.3} parent=39 // pred_check
          %p1037 = pneg %p184
        $region50: #{multi_head_attention.3} parent=39 // pred_check_branch
          %1039 = sbr.rel (%p1037) target = $region52
        $region51: #{multi_head_attention.3} parent=39 // pred_region
          %s1041 = ssub.s32 64, 64
          %1042 = vsyncadd %s1033, %s1041
          %s1043 = sadd.s32 %s25, %s24
          %s1044 = smul.addr %s1043, 64
          %s1045 = scalar_lea.hbm %s5, %s1044
          %s1047 = sshll.u32 %s1036, 4
          %s1048 = int_to_ptr.vmem [resolvable:$true] %s1047
          %1050 = dma.vmem_to_hbm [thread:$0]  %s1048, 64, %s1045, %s1033
        $region52: #{multi_head_attention.3} parent=39 // pred_fallthru
          _
      $region40: #{multi_head_attention.3} parent=5 // pred_fallthru
        _
      %p1051 = scmp.le.s32.totalorder 2, %s14
      // Predicated region
      $region53: #{multi_head_attention.3} parent=5 // pred_check
        %p1052 = pneg %p1051
      $region54: #{multi_head_attention.3} parent=5 // pred_check_branch
        %1054 = sbr.rel (%p1052) target = $region56
      $region55: #{multi_head_attention.3} parent=5 // pred_region
        %s1055 = ssub.s32 %s14, 2
        // Predicated region
        $region57: #{multi_head_attention.3} parent=55 // pred_check
          %p1056 = pneg %p190
        $region58: #{multi_head_attention.3} parent=55 // pred_check_branch
          %1058 = sbr.rel (%p1056) target = $region60
        $region59: #{multi_head_attention.3} parent=55 // pred_region
          %s1059 = sand.u32 %s175, 1
          %s1060 = scalar_lea.sflag [#allocation5], %s1059
          %s1061 = sand.u32 %s175, 1
          %s1062 = smul.addr %s1061, 4
          %s1063 = scalar_lea.vmem [#allocation4], %s1062
          %1064 = dma.done %s1060, 64
        $region60: #{multi_head_attention.3} parent=55 // pred_fallthru
          _
      $region56: #{multi_head_attention.3} parent=5 // pred_fallthru
        _
    $region6: #{multi_head_attention.3} parent=1 // loop_footer
      %s18 = sadd.s32 1, %s14
    $region7: #{multi_head_attention.3} parent=1 // loop_footer_branch
      %13 = sbr.rel target = $region3
    $region8: #{multi_head_attention.3} parent=1 // loop_exit
      _
    %1065 = vsyncpa [#allocation5], 1
    %s1066 = scalar_lea.sflag [#allocation5], 1
    %1067 = vsyncpa %s1066, 1

// kernel: multi_head_attention.2
$region0: #{multi_head_attention.2}
  #allocation0 [shape = 'u32[]', space=smem, size = 0x4, offset = 0x4, fixed_abs, tag = 'smem constant byte address 0x4 - core index']
  #allocation1 [shape = 'u32[144,128]{1,0:T(1,128)}', space=vmem, size = 0x12000, scoped, tag = 'internal scratch']
  %s0 = inlined_call_operand.vmem [shape: bf16[2,8,128], index: 0, kind: input, shape index: {}]
  %s1 = inlined_call_operand.vmem [shape: bf16[2,8,128], index: 1, kind: input, shape index: {}]
  %s2 = inlined_call_operand.vmem [shape: bf16[2,8,128], index: 2, kind: input, shape index: {}]
  %s3 = inlined_call_operand.vmem [shape: bf16[128,128], index: 3, kind: input, shape index: {}]
  %s4 = inlined_call_operand.vmem [shape: bf16[128,128], index: 4, kind: input, shape index: {}]
  %s5 = inlined_call_operand.vmem [shape: bf16[128,128], index: 5, kind: input, shape index: {}]
  %s6 = inlined_call_operand.vmem [shape: bf16[2,8,128], index: 6, kind: output, shape index: {0}]
  %s7 = inlined_call_operand.vmem [shape: bf16[2,8,128], index: 7, kind: output, shape index: {1}]
  %s8 = inlined_call_operand.vmem [shape: bf16[2,8,128], index: 8, kind: output, shape index: {2}]
  %9 = xla_tuple %s6, %s7, %s8
  %s10 = sld [smem:[#allocation0]]
  $region73: #{multi_head_attention.2} parent=0
    _
  %s12 = ssub.s32 1, %s10
  %s13 = scalar_select 0, %s12, %s10
  loop: start=0, step=1, limit=4
  $region2: #{multi_head_attention.2} parent=0 // loop_pre_header
    _
  $region3: #{multi_head_attention.2} parent=0 // loop_header
    %s15 = sphi 0, %s19
    %p16 = scmp.ge.s32.totalorder %s15, 4
    %s22 = sphi 0, %s34
    %s23 = sphi 0, %s30
    %s24 = sphi 0, %s22
    %s25 = sphi 0, %s23
    %s26 = sphi 0, %s24
    %s27 = sphi 0, %s25
    %s39 = sphi 0, %s41
    %s42 = sphi 0, %s39
    %s43 = sphi 0, %s42
    %s59 = sphi 0, %s43
    %s67 = sphi 0, %s69
    %s70 = sphi 0, %s67
    %s71 = sphi 0, %s70
    %s87 = sphi 0, %s71
    %s95 = sphi 0, %s97
    %s98 = sphi 0, %s95
    %s99 = sphi 0, %s98
    %s115 = sphi 0, %s99
    %s119 = sphi 0, %s119
    %s121 = sphi 0, %s119
    %s122 = sphi 0, %s121
    %s136 = sphi 0, %s122
    %s140 = sphi 0, %s140
    %s142 = sphi 0, %s140
    %s143 = sphi 0, %s142
    %s157 = sphi 0, %s143
    %s161 = sphi 0, %s161
    %s163 = sphi 0, %s161
    %s164 = sphi 0, %s163
    %s178 = sphi 0, %s164
    %s186 = sphi 0, %s188
    %s189 = sphi 0, %s186
    %s190 = sphi 0, %s189
    %s206 = sphi 0, %s190
    %s214 = sphi 0, %s216
    %s217 = sphi 0, %s214
    %s218 = sphi 0, %s217
    %s234 = sphi 0, %s218
    %s242 = sphi 0, %s244
    %s245 = sphi 0, %s242
    %s246 = sphi 0, %s245
    %s262 = sphi 0, %s246
  $region4: #{multi_head_attention.2} parent=0 // loop_header_branch
    %18 = sbr.rel (%p16) target = $region8
  $region5: #{multi_head_attention.2} parent=0 // loop_body
    %s20 = ssub.s32 %s15, 1
    %s21 = ssub.s32 %s15, 2
    %s28 = sadd.s32 1, %s23
    %p29 = scmp.ge.s32.totalorder %s28, 1
    %s30 = scalar_select %p29, 0, %s28
    %s31 = sadd.s32 1, %s22
    %s32 = scalar_select %p29, %s31, %s22
    %p33 = scmp.ge.s32.totalorder %s32, 2
    %s34 = scalar_select %p33, 0, %s32
    %s35 = ssub.s32 %s22, %s34
    %s36 = ssub.s32 %s23, %s30
    %s37 = sor.u32 %s35, %s36
    %p38 = scmp.eq.s32.totalorder %s37, 0
    %s40 = sadd.s32 %s39, 1
    %s41 = scalar_select %p38, %s39, %s40
    %p44 = pneg %p38
    %p45 = scmp.eq.s32.totalorder %s15, 1
    %p46 = por %p44, %p45
    %p47 = scmp.ne.s32.totalorder %s39, %s42
    %p48 = scmp.eq.s32.totalorder %s15, 0
    %p49 = por %p47, %p48
    %p50 = scmp.ne.s32.totalorder %s39, %s42
    %p51 = scmp.eq.s32.totalorder %s20, 1
    %p52 = por %p50, %p51
    %p53 = scmp.ne.s32.totalorder %s42, %s43
    %p54 = scmp.eq.s32.totalorder %s20, 0
    %p55 = por %p53, %p54
    %p56 = scmp.ne.s32.totalorder %s42, %s43
    %p57 = scmp.eq.s32.totalorder %s21, 1
    %p58 = por %p56, %p57
    %p60 = scmp.ne.s32.totalorder %s43, %s59
    %p61 = scmp.eq.s32.totalorder %s21, 0
    %p62 = por %p60, %p61
    %s63 = ssub.s32 %s22, %s34
    %s64 = ssub.s32 %s23, %s30
    %s65 = sor.u32 %s63, %s64
    %p66 = scmp.eq.s32.totalorder %s65, 0
    %s68 = sadd.s32 %s67, 1
    %s69 = scalar_select %p66, %s67, %s68
    %p72 = pneg %p66
    %p73 = scmp.eq.s32.totalorder %s15, 1
    %p74 = por %p72, %p73
    %p75 = scmp.ne.s32.totalorder %s67, %s70
    %p76 = scmp.eq.s32.totalorder %s15, 0
    %p77 = por %p75, %p76
    %p78 = scmp.ne.s32.totalorder %s67, %s70
    %p79 = scmp.eq.s32.totalorder %s20, 1
    %p80 = por %p78, %p79
    %p81 = scmp.ne.s32.totalorder %s70, %s71
    %p82 = scmp.eq.s32.totalorder %s20, 0
    %p83 = por %p81, %p82
    %p84 = scmp.ne.s32.totalorder %s70, %s71
    %p85 = scmp.eq.s32.totalorder %s21, 1
    %p86 = por %p84, %p85
    %p88 = scmp.ne.s32.totalorder %s71, %s87
    %p89 = scmp.eq.s32.totalorder %s21, 0
    %p90 = por %p88, %p89
    %s91 = ssub.s32 %s22, %s34
    %s92 = ssub.s32 %s23, %s30
    %s93 = sor.u32 %s91, %s92
    %p94 = scmp.eq.s32.totalorder %s93, 0
    %s96 = sadd.s32 %s95, 1
    %s97 = scalar_select %p94, %s95, %s96
    %p100 = pneg %p94
    %p101 = scmp.eq.s32.totalorder %s15, 1
    %p102 = por %p100, %p101
    %p103 = scmp.ne.s32.totalorder %s95, %s98
    %p104 = scmp.eq.s32.totalorder %s15, 0
    %p105 = por %p103, %p104
    %p106 = scmp.ne.s32.totalorder %s95, %s98
    %p107 = scmp.eq.s32.totalorder %s20, 1
    %p108 = por %p106, %p107
    %p109 = scmp.ne.s32.totalorder %s98, %s99
    %p110 = scmp.eq.s32.totalorder %s20, 0
    %p111 = por %p109, %p110
    %p112 = scmp.ne.s32.totalorder %s98, %s99
    %p113 = scmp.eq.s32.totalorder %s21, 1
    %p114 = por %p112, %p113
    %p116 = scmp.ne.s32.totalorder %s99, %s115
    %p117 = scmp.eq.s32.totalorder %s21, 0
    %p118 = por %p116, %p117
    %s120 = sadd.s32 %s119, 1
    %p123 = scmp.eq.s32.totalorder %s15, 1
    %p124 = scmp.ne.s32.totalorder %s119, %s121
    %p125 = scmp.eq.s32.totalorder %s15, 0
    %p126 = por %p124, %p125
    %p127 = scmp.ne.s32.totalorder %s119, %s121
    %p128 = scmp.eq.s32.totalorder %s20, 1
    %p129 = por %p127, %p128
    %p130 = scmp.ne.s32.totalorder %s121, %s122
    %p131 = scmp.eq.s32.totalorder %s20, 0
    %p132 = por %p130, %p131
    %p133 = scmp.ne.s32.totalorder %s121, %s122
    %p134 = scmp.eq.s32.totalorder %s21, 1
    %p135 = por %p133, %p134
    %p137 = scmp.ne.s32.totalorder %s122, %s136
    %p138 = scmp.eq.s32.totalorder %s21, 0
    %p139 = por %p137, %p138
    %s141 = sadd.s32 %s140, 1
    %p144 = scmp.eq.s32.totalorder %s15, 1
    %p145 = scmp.ne.s32.totalorder %s140, %s142
    %p146 = scmp.eq.s32.totalorder %s15, 0
    %p147 = por %p145, %p146
    %p148 = scmp.ne.s32.totalorder %s140, %s142
    %p149 = scmp.eq.s32.totalorder %s20, 1
    %p150 = por %p148, %p149
    %p151 = scmp.ne.s32.totalorder %s142, %s143
    %p152 = scmp.eq.s32.totalorder %s20, 0
    %p153 = por %p151, %p152
    %p154 = scmp.ne.s32.totalorder %s142, %s143
    %p155 = scmp.eq.s32.totalorder %s21, 1
    %p156 = por %p154, %p155
    %p158 = scmp.ne.s32.totalorder %s143, %s157
    %p159 = scmp.eq.s32.totalorder %s21, 0
    %p160 = por %p158, %p159
    %s162 = sadd.s32 %s161, 1
    %p165 = scmp.eq.s32.totalorder %s15, 1
    %p166 = scmp.ne.s32.totalorder %s161, %s163
    %p167 = scmp.eq.s32.totalorder %s15, 0
    %p168 = por %p166, %p167
    %p169 = scmp.ne.s32.totalorder %s161, %s163
    %p170 = scmp.eq.s32.totalorder %s20, 1
    %p171 = por %p169, %p170
    %p172 = scmp.ne.s32.totalorder %s163, %s164
    %p173 = scmp.eq.s32.totalorder %s20, 0
    %p174 = por %p172, %p173
    %p175 = scmp.ne.s32.totalorder %s163, %s164
    %p176 = scmp.eq.s32.totalorder %s21, 1
    %p177 = por %p175, %p176
    %p179 = scmp.ne.s32.totalorder %s164, %s178
    %p180 = scmp.eq.s32.totalorder %s21, 0
    %p181 = por %p179, %p180
    %s182 = ssub.s32 %s22, %s34
    %s183 = ssub.s32 %s23, %s30
    %s184 = sor.u32 %s182, %s183
    %p185 = scmp.eq.s32.totalorder %s184, 0
    %s187 = sadd.s32 %s186, 1
    %s188 = scalar_select %p185, %s186, %s187
    %p191 = pneg %p185
    %p192 = scmp.eq.s32.totalorder %s15, 1
    %p193 = por %p191, %p192
    %p194 = scmp.ne.s32.totalorder %s186, %s189
    %p195 = scmp.eq.s32.totalorder %s15, 0
    %p196 = por %p194, %p195
    %p197 = scmp.ne.s32.totalorder %s186, %s189
    %p198 = scmp.eq.s32.totalorder %s20, 1
    %p199 = por %p197, %p198
    %p200 = scmp.ne.s32.totalorder %s189, %s190
    %p201 = scmp.eq.s32.totalorder %s20, 0
    %p202 = por %p200, %p201
    %p203 = scmp.ne.s32.totalorder %s189, %s190
    %p204 = scmp.eq.s32.totalorder %s21, 1
    %p205 = por %p203, %p204
    %p207 = scmp.ne.s32.totalorder %s190, %s206
    %p208 = scmp.eq.s32.totalorder %s21, 0
    %p209 = por %p207, %p208
    %s210 = ssub.s32 %s22, %s34
    %s211 = ssub.s32 %s23, %s30
    %s212 = sor.u32 %s210, %s211
    %p213 = scmp.eq.s32.totalorder %s212, 0
    %s215 = sadd.s32 %s214, 1
    %s216 = scalar_select %p213, %s214, %s215
    %p219 = pneg %p213
    %p220 = scmp.eq.s32.totalorder %s15, 1
    %p221 = por %p219, %p220
    %p222 = scmp.ne.s32.totalorder %s214, %s217
    %p223 = scmp.eq.s32.totalorder %s15, 0
    %p224 = por %p222, %p223
    %p225 = scmp.ne.s32.totalorder %s214, %s217
    %p226 = scmp.eq.s32.totalorder %s20, 1
    %p227 = por %p225, %p226
    %p228 = scmp.ne.s32.totalorder %s217, %s218
    %p229 = scmp.eq.s32.totalorder %s20, 0
    %p230 = por %p228, %p229
    %p231 = scmp.ne.s32.totalorder %s217, %s218
    %p232 = scmp.eq.s32.totalorder %s21, 1
    %p233 = por %p231, %p232
    %p235 = scmp.ne.s32.totalorder %s218, %s234
    %p236 = scmp.eq.s32.totalorder %s21, 0
    %p237 = por %p235, %p236
    %s238 = ssub.s32 %s22, %s34
    %s239 = ssub.s32 %s23, %s30
    %s240 = sor.u32 %s238, %s239
    %p241 = scmp.eq.s32.totalorder %s240, 0
    %s243 = sadd.s32 %s242, 1
    %s244 = scalar_select %p241, %s242, %s243
    %p247 = pneg %p241
    %p248 = scmp.eq.s32.totalorder %s15, 1
    %p249 = por %p247, %p248
    %p250 = scmp.ne.s32.totalorder %s242, %s245
    %p251 = scmp.eq.s32.totalorder %s15, 0
    %p252 = por %p250, %p251
    %p253 = scmp.ne.s32.totalorder %s242, %s245
    %p254 = scmp.eq.s32.totalorder %s20, 1
    %p255 = por %p253, %p254
    %p256 = scmp.ne.s32.totalorder %s245, %s246
    %p257 = scmp.eq.s32.totalorder %s20, 0
    %p258 = por %p256, %p257
    %p259 = scmp.ne.s32.totalorder %s245, %s246
    %p260 = scmp.eq.s32.totalorder %s21, 1
    %p261 = por %p259, %p260
    %p263 = scmp.ne.s32.totalorder %s246, %s262
    %p264 = scmp.eq.s32.totalorder %s21, 0
    %p265 = por %p263, %p264
    %p266 = scmp.le.s32.totalorder 1, %s15
    %p267 = scmp.lt.s32.totalorder %s15, 3
    %p268 = pnand %p266, %p267
    %p269 = pneg %p268
    // Predicated region
    $region9: #{multi_head_attention.2} parent=5 // pred_check
      _
    $region10: #{multi_head_attention.2} parent=5 // pred_check_branch
      %271 = sbr.rel (%p268) target = $region12
    $region11: #{multi_head_attention.2} parent=5 // pred_region
      %s272 = ssub.s32 %s15, 1
      // Predicated region
      $region13: #{multi_head_attention.2} parent=11 // pred_check
        %p273 = pneg %p132
      $region14: #{multi_head_attention.2} parent=11 // pred_check_branch
        %275 = sbr.rel (%p273) target = $region16
      $region15: #{multi_head_attention.2} parent=11 // pred_region
        _
      $region16: #{multi_head_attention.2} parent=11 // pred_fallthru
        _
      // Predicated region
      $region17: #{multi_head_attention.2} parent=11 // pred_check
        %p276 = pneg %p153
      $region18: #{multi_head_attention.2} parent=11 // pred_check_branch
        %278 = sbr.rel (%p276) target = $region20
      $region19: #{multi_head_attention.2} parent=11 // pred_region
        _
      $region20: #{multi_head_attention.2} parent=11 // pred_fallthru
        _
      // Predicated region
      $region21: #{multi_head_attention.2} parent=11 // pred_check
        %p279 = pneg %p174
      $region22: #{multi_head_attention.2} parent=11 // pred_check_branch
        %281 = sbr.rel (%p279) target = $region24
      $region23: #{multi_head_attention.2} parent=11 // pred_region
        _
      $region24: #{multi_head_attention.2} parent=11 // pred_fallthru
        _
    $region12: #{multi_head_attention.2} parent=5 // pred_fallthru
      _
    %p282 = scmp.lt.s32.totalorder %s15, 2
    // Predicated region
    $region25: #{multi_head_attention.2} parent=5 // pred_check
      %p283 = pneg %p282
    $region26: #{multi_head_attention.2} parent=5 // pred_check_branch
      %285 = sbr.rel (%p283) target = $region28
    $region27: #{multi_head_attention.2} parent=5 // pred_region
      // Predicated region
      $region29: #{multi_head_attention.2} parent=27 // pred_check
        %p286 = pneg %p49
      $region30: #{multi_head_attention.2} parent=27 // pred_check_branch
        %288 = sbr.rel (%p286) target = $region32
      $region31: #{multi_head_attention.2} parent=27 // pred_region
        %p289 = scmp.lt.s32.totalorder %s22, 1
        %s290 = scalar_select %p289, %s22, 1
        %p291 = scmp.lt.s32.totalorder %s23, 0
        %s292 = scalar_select %p291, %s23, 0
        %s293 = sadd.s32 %s292, %s290
        %s294 = smul.addr %s293, 4
        %s295 = scalar_lea.vmem %s0, %s294
      $region32: #{multi_head_attention.2} parent=27 // pred_fallthru
        _
      // Predicated region
      $region33: #{multi_head_attention.2} parent=27 // pred_check
        %p296 = pneg %p77
      $region34: #{multi_head_attention.2} parent=27 // pred_check_branch
        %298 = sbr.rel (%p296) target = $region36
      $region35: #{multi_head_attention.2} parent=27 // pred_region
        %p299 = scmp.lt.s32.totalorder %s22, 1
        %s300 = scalar_select %p299, %s22, 1
        %p301 = scmp.lt.s32.totalorder %s23, 0
        %s302 = scalar_select %p301, %s23, 0
        %s303 = sadd.s32 %s302, %s300
        %s304 = smul.addr %s303, 4
        %s305 = scalar_lea.vmem %s1, %s304
      $region36: #{multi_head_attention.2} parent=27 // pred_fallthru
        _
      // Predicated region
      $region37: #{multi_head_attention.2} parent=27 // pred_check
        %p306 = pneg %p105
      $region38: #{multi_head_attention.2} parent=27 // pred_check_branch
        %308 = sbr.rel (%p306) target = $region40
      $region39: #{multi_head_attention.2} parent=27 // pred_region
        %p309 = scmp.lt.s32.totalorder %s22, 1
        %s310 = scalar_select %p309, %s22, 1
        %p311 = scmp.lt.s32.totalorder %s23, 0
        %s312 = scalar_select %p311, %s23, 0
        %s313 = sadd.s32 %s312, %s310
        %s314 = smul.addr %s313, 4
        %s315 = scalar_lea.vmem %s2, %s314
      $region40: #{multi_head_attention.2} parent=27 // pred_fallthru
        _
    $region28: #{multi_head_attention.2} parent=5 // pred_fallthru
      _
    %p316 = scmp.le.s32.totalorder 1, %s15
    %p317 = scmp.lt.s32.totalorder %s15, 3
    %p318 = pnand %p316, %p317
    %p319 = pneg %p318
    // Predicated region
    $region41: #{multi_head_attention.2} parent=5 // pred_check
      _
    $region42: #{multi_head_attention.2} parent=5 // pred_check_branch
      %321 = sbr.rel (%p318) target = $region44
    $region43: #{multi_head_attention.2} parent=5 // pred_region
      %s322 = ssub.s32 %s15, 1
      %p323 = scmp.lt.s32.totalorder %s24, 1
      %s324 = scalar_select %p323, %s24, 1
      %p325 = scmp.lt.s32.totalorder %s25, 0
      %s326 = scalar_select %p325, %s25, 0
      %s327 = sadd.s32 %s326, %s324
      %s328 = smul.addr %s327, 4
      %s329 = scalar_lea.vmem %s0, %s328
      %p330 = pneg %p55
      %p331 = pneg %p52
      %p332 = scmp.lt.s32.totalorder %s24, 1
      %s333 = scalar_select %p332, %s24, 1
      %p334 = scmp.lt.s32.totalorder %s25, 0
      %s335 = scalar_select %p334, %s25, 0
      %s336 = sadd.s32 %s335, %s333
      %s337 = smul.addr %s336, 4
      %s338 = scalar_lea.vmem %s1, %s337
      %p339 = pneg %p83
      %p340 = pneg %p80
      %p341 = scmp.lt.s32.totalorder %s24, 1
      %s342 = scalar_select %p341, %s24, 1
      %p343 = scmp.lt.s32.totalorder %s25, 0
      %s344 = scalar_select %p343, %s25, 0
      %s345 = sadd.s32 %s344, %s342
      %s346 = smul.addr %s345, 4
      %s347 = scalar_lea.vmem %s2, %s346
      %p348 = pneg %p111
      %p349 = pneg %p108
      %p350 = pneg %p132
      %p351 = pneg %p129
      %p352 = pneg %p153
      %p353 = pneg %p150
      %p354 = pneg %p174
      %p355 = pneg %p171
      %p356 = pneg %p202
      %p357 = pneg %p199
      %p358 = scmp.lt.s32.totalorder %s24, 1
      %s359 = scalar_select %p358, %s24, 1
      %p360 = scmp.lt.s32.totalorder %s25, 0
      %s361 = scalar_select %p360, %s25, 0
      %s362 = sadd.s32 %s361, %s359
      %s363 = smul.addr %s362, 4
      %s364 = scalar_lea.vmem %s6, %s363
      %p365 = pneg %p230
      %p366 = pneg %p227
      %p367 = scmp.lt.s32.totalorder %s24, 1
      %s368 = scalar_select %p367, %s24, 1
      %p369 = scmp.lt.s32.totalorder %s25, 0
      %s370 = scalar_select %p369, %s25, 0
      %s371 = sadd.s32 %s370, %s368
      %s372 = smul.addr %s371, 4
      %s373 = scalar_lea.vmem %s7, %s372
      %p374 = pneg %p258
      %p375 = pneg %p255
      %p376 = scmp.lt.s32.totalorder %s24, 1
      %s377 = scalar_select %p376, %s24, 1
      %p378 = scmp.lt.s32.totalorder %s25, 0
      %s379 = scalar_select %p378, %s25, 0
      %s380 = sadd.s32 %s379, %s377
      %s381 = smul.addr %s380, 4
      %s382 = scalar_lea.vmem %s8, %s381
      %p383 = scmp.lt.s32.totalorder %s24, 1
      %s384 = scalar_select %p383, %s24, 1
      %p385 = scmp.lt.s32.totalorder %s25, 0
      %s386 = scalar_select %p385, %s25, 0
      %s387 = sadd.s32 %s386, %s384
      %s388 = smul.addr %s387, 4
      %s389 = scalar_lea.vmem %s0, %s388
      %p390 = scmp.lt.s32.totalorder %s24, 1
      %s391 = scalar_select %p390, %s24, 1
      %p392 = scmp.lt.s32.totalorder %s25, 0
      %s393 = scalar_select %p392, %s25, 0
      %s394 = sadd.s32 %s393, %s391
      %s395 = smul.addr %s394, 4
      %s396 = scalar_lea.vmem %s1, %s395
      %p397 = scmp.lt.s32.totalorder %s24, 1
      %s398 = scalar_select %p397, %s24, 1
      %p399 = scmp.lt.s32.totalorder %s25, 0
      %s400 = scalar_select %p399, %s25, 0
      %s401 = sadd.s32 %s400, %s398
      %s402 = smul.addr %s401, 4
      %s403 = scalar_lea.vmem %s2, %s402
      %p404 = scmp.lt.s32.totalorder %s24, 1
      %s405 = scalar_select %p404, %s24, 1
      %p406 = scmp.lt.s32.totalorder %s25, 0
      %s407 = scalar_select %p406, %s25, 0
      %s408 = sadd.s32 %s407, %s405
      %s409 = smul.addr %s408, 4
      %s410 = scalar_lea.vmem %s6, %s409
      %p411 = scmp.lt.s32.totalorder %s24, 1
      %s412 = scalar_select %p411, %s24, 1
      %p413 = scmp.lt.s32.totalorder %s25, 0
      %s414 = scalar_select %p413, %s25, 0
      %s415 = sadd.s32 %s414, %s412
      %s416 = smul.addr %s415, 4
      %s417 = scalar_lea.vmem %s7, %s416
      %p418 = scmp.lt.s32.totalorder %s24, 1
      %s419 = scalar_select %p418, %s24, 1
      %p420 = scmp.lt.s32.totalorder %s25, 0
      %s421 = scalar_select %p420, %s25, 0
      %s422 = sadd.s32 %s421, %s419
      %s423 = smul.addr %s422, 4
      %s424 = scalar_lea.vmem %s8, %s423
      %v426 = vld [vmem:[%s389] sm:$0xf]
      %v427 = vld [vmem:[%s3] sm:$0xf]
      %v428 = vld [vmem:[%s3 + $0x4] sm:$0xf]
      %v429 = vld [vmem:[%s3 + $0x8] sm:$0xf]
      %v430 = vld [vmem:[%s3 + $0xc] sm:$0xf]
      %v431 = vld [vmem:[%s3 + $0x10] sm:$0xf]
      %v432 = vld [vmem:[%s3 + $0x14] sm:$0xf]
      %v433 = vld [vmem:[%s3 + $0x18] sm:$0xf]
      %v434 = vld [vmem:[%s3 + $0x1c] sm:$0xf]
      %v435 = vld [vmem:[%s3 + $0x20] sm:$0xf]
      %v436 = vld [vmem:[%s3 + $0x24] sm:$0xf]
      %v437 = vld [vmem:[%s3 + $0x28] sm:$0xf]
      %v438 = vld [vmem:[%s3 + $0x2c] sm:$0xf]
      %v439 = vld [vmem:[%s3 + $0x30] sm:$0xf]
      %v440 = vld [vmem:[%s3 + $0x34] sm:$0xf]
      %v441 = vld [vmem:[%s3 + $0x38] sm:$0xf]
      %v442 = vld [vmem:[%s3 + $0x3c] sm:$0xf]
      %v459 = vunpack.c.l.b16 %v427
      %v460 = vunpack.c.l.b16 %v428
      %v461 = vunpack.c.l.b16 %v429
      %v462 = vunpack.c.l.b16 %v430
      %v463 = vunpack.c.l.b16 %v431
      %v464 = vunpack.c.l.b16 %v432
      %v465 = vunpack.c.l.b16 %v433
      %v466 = vunpack.c.l.b16 %v434
      %v467 = vunpack.c.l.b16 %v435
      %v468 = vunpack.c.l.b16 %v436
      %v469 = vunpack.c.l.b16 %v437
      %v470 = vunpack.c.l.b16 %v438
      %v471 = vunpack.c.l.b16 %v439
      %v472 = vunpack.c.l.b16 %v440
      %v473 = vunpack.c.l.b16 %v441
      %v474 = vunpack.c.l.b16 %v442
      %v475 = vpack.c.b16 %v460, %v459
      %v476 = vpack.c.b16 %v462, %v461
      %v477 = vpack.c.b16 %v464, %v463
      %v478 = vpack.c.b16 %v466, %v465
      %v479 = vpack.c.b16 %v468, %v467
      %v480 = vpack.c.b16 %v470, %v469
      %v481 = vpack.c.b16 %v472, %v471
      %v482 = vpack.c.b16 %v474, %v473
      %491 = vmatprep.subr.bf16.mxu0 0
      %492 = vmatpush1.bf16.msra.mxu0 %v482
      %493 = vmatprep.subr.bf16.mxu0 0
      %494 = vmatpush1.bf16.msra.mxu0 %v481
      %495 = vmatprep.subr.bf16.mxu0 0
      %496 = vmatpush1.bf16.msra.mxu0 %v480
      %497 = vmatprep.subr.bf16.mxu0 0
      %498 = vmatpush1.bf16.msra.mxu0 %v479
      %499 = vmatprep.subr.bf16.mxu0 0
      %500 = vmatpush1.bf16.msra.mxu0 %v478
      %501 = vmatprep.subr.bf16.mxu0 0
      %502 = vmatpush1.bf16.msra.mxu0 %v477
      %503 = vmatprep.subr.bf16.mxu0 0
      %504 = vmatpush1.bf16.msra.mxu0 %v476
      %505 = vmatprep.subr.bf16.mxu0 0
      %506 = vmatpush1.bf16.msra.mxu0 %v475
      %507 = vmatprep.subr.bf16.mxu0 0
      %508 = vmatpush2.bf16.msra.mxu0 0
      %509 = vmatprep.subr.bf16.mxu0 0
      %510 = vmatpush2.bf16.msra.mxu0 0
      %511 = vmatprep.subr.bf16.mxu0 0
      %512 = vmatpush2.bf16.msra.mxu0 0
      %513 = vmatprep.subr.bf16.mxu0 0
      %514 = vmatpush2.bf16.msra.mxu0 0
      %515 = vmatprep.subr.bf16.mxu0 0
      %516 = vmatpush2.bf16.msra.mxu0 0
      %517 = vmatprep.subr.bf16.mxu0 0
      %518 = vmatpush2.bf16.msra.mxu0 0
      %519 = vmatprep.subr.bf16.mxu0 0
      %520 = vmatpush2.bf16.msra.mxu0 0
      %521 = vmatprep.subr.bf16.mxu0 0
      %522 = vmatpush2.bf16.msra.mxu0 0
      %523 = vmatprep.mubr.bf16.mxu0 0
      %524 = vmatmul.mubr.bf16.gmra.mxu0 %v426
      %v525 = vpop.f32.mrf.mxu0
      %v526 = vadd.f32 0.0, %v525
      %v527 = vpop.f32.mrf.mxu0
      %v528 = vpop.f32.mrf.mxu0
      %v529 = vpop.f32.mrf.mxu0
      %530 = vdwg.mxu0
      %v531 = vmul.f32 %v526, 0.17677669
      %v532 = vpack.c.bf16 %v531, %v531
      %533 = vst [vmem:[%s410] sm:$0xf] %v532
      %v534 = vld [vmem:[%s396] sm:$0xf]
      %v535 = vld [vmem:[%s4] sm:$0xf]
      %v536 = vld [vmem:[%s4 + $0x4] sm:$0xf]
      %v537 = vld [vmem:[%s4 + $0x8] sm:$0xf]
      %v538 = vld [vmem:[%s4 + $0xc] sm:$0xf]
      %v539 = vld [vmem:[%s4 + $0x10] sm:$0xf]
      %v540 = vld [vmem:[%s4 + $0x14] sm:$0xf]
      %v541 = vld [vmem:[%s4 + $0x18] sm:$0xf]
      %v542 = vld [vmem:[%s4 + $0x1c] sm:$0xf]
      %v543 = vld [vmem:[%s4 + $0x20] sm:$0xf]
      %v544 = vld [vmem:[%s4 + $0x24] sm:$0xf]
      %v545 = vld [vmem:[%s4 + $0x28] sm:$0xf]
      %v546 = vld [vmem:[%s4 + $0x2c] sm:$0xf]
      %v547 = vld [vmem:[%s4 + $0x30] sm:$0xf]
      %v548 = vld [vmem:[%s4 + $0x34] sm:$0xf]
      %v549 = vld [vmem:[%s4 + $0x38] sm:$0xf]
      %v550 = vld [vmem:[%s4 + $0x3c] sm:$0xf]
      %v567 = vunpack.c.l.b16 %v535
      %v568 = vunpack.c.l.b16 %v536
      %v569 = vunpack.c.l.b16 %v537
      %v570 = vunpack.c.l.b16 %v538
      %v571 = vunpack.c.l.b16 %v539
      %v572 = vunpack.c.l.b16 %v540
      %v573 = vunpack.c.l.b16 %v541
      %v574 = vunpack.c.l.b16 %v542
      %v575 = vunpack.c.l.b16 %v543
      %v576 = vunpack.c.l.b16 %v544
      %v577 = vunpack.c.l.b16 %v545
      %v578 = vunpack.c.l.b16 %v546
      %v579 = vunpack.c.l.b16 %v547
      %v580 = vunpack.c.l.b16 %v548
      %v581 = vunpack.c.l.b16 %v549
      %v582 = vunpack.c.l.b16 %v550
      %v583 = vpack.c.b16 %v568, %v567
      %v584 = vpack.c.b16 %v570, %v569
      %v585 = vpack.c.b16 %v572, %v571
      %v586 = vpack.c.b16 %v574, %v573
      %v587 = vpack.c.b16 %v576, %v575
      %v588 = vpack.c.b16 %v578, %v577
      %v589 = vpack.c.b16 %v580, %v579
      %v590 = vpack.c.b16 %v582, %v581
      %599 = vmatprep.subr.bf16.mxu0 0
      %600 = vmatpush1.bf16.msra.mxu0 %v590
      %601 = vmatprep.subr.bf16.mxu0 0
      %602 = vmatpush1.bf16.msra.mxu0 %v589
      %603 = vmatprep.subr.bf16.mxu0 0
      %604 = vmatpush1.bf16.msra.mxu0 %v588
      %605 = vmatprep.subr.bf16.mxu0 0
      %606 = vmatpush1.bf16.msra.mxu0 %v587
      %607 = vmatprep.subr.bf16.mxu0 0
      %608 = vmatpush1.bf16.msra.mxu0 %v586
      %609 = vmatprep.subr.bf16.mxu0 0
      %610 = vmatpush1.bf16.msra.mxu0 %v585
      %611 = vmatprep.subr.bf16.mxu0 0
      %612 = vmatpush1.bf16.msra.mxu0 %v584
      %613 = vmatprep.subr.bf16.mxu0 0
      %614 = vmatpush1.bf16.msra.mxu0 %v583
      %615 = vmatprep.subr.bf16.mxu0 0
      %616 = vmatpush2.bf16.msra.mxu0 0
      %617 = vmatprep.subr.bf16.mxu0 0
      %618 = vmatpush2.bf16.msra.mxu0 0
      %619 = vmatprep.subr.bf16.mxu0 0
      %620 = vmatpush2.bf16.msra.mxu0 0
      %621 = vmatprep.subr.bf16.mxu0 0
      %622 = vmatpush2.bf16.msra.mxu0 0
      %623 = vmatprep.subr.bf16.mxu0 0
      %624 = vmatpush2.bf16.msra.mxu0 0
      %625 = vmatprep.subr.bf16.mxu0 0
      %626 = vmatpush2.bf16.msra.mxu0 0
      %627 = vmatprep.subr.bf16.mxu0 0
      %628 = vmatpush2.bf16.msra.mxu0 0
      %629 = vmatprep.subr.bf16.mxu0 0
      %630 = vmatpush2.bf16.msra.mxu0 0
      %631 = vmatprep.mubr.bf16.mxu0 0
      %632 = vmatmul.mubr.bf16.gmra.mxu0 %v534
      %v633 = vpop.f32.mrf.mxu0
      %v634 = vadd.f32 0.0, %v633
      %v635 = vpop.f32.mrf.mxu0
      %v636 = vpop.f32.mrf.mxu0
      %v637 = vpop.f32.mrf.mxu0
      %638 = vdwg.mxu0
      %v639 = vpack.c.bf16 %v634, %v634
      %640 = vst [vmem:[%s417] sm:$0xf] %v639
      %v641 = vld [vmem:[%s403] sm:$0xf]
      %v642 = vld [vmem:[%s5] sm:$0xf]
      %v643 = vld [vmem:[%s5 + $0x4] sm:$0xf]
      %v644 = vld [vmem:[%s5 + $0x8] sm:$0xf]
      %v645 = vld [vmem:[%s5 + $0xc] sm:$0xf]
      %v646 = vld [vmem:[%s5 + $0x10] sm:$0xf]
      %v647 = vld [vmem:[%s5 + $0x14] sm:$0xf]
      %v648 = vld [vmem:[%s5 + $0x18] sm:$0xf]
      %v649 = vld [vmem:[%s5 + $0x1c] sm:$0xf]
      %v650 = vld [vmem:[%s5 + $0x20] sm:$0xf]
      %v651 = vld [vmem:[%s5 + $0x24] sm:$0xf]
      %v652 = vld [vmem:[%s5 + $0x28] sm:$0xf]
      %v653 = vld [vmem:[%s5 + $0x2c] sm:$0xf]
      %v654 = vld [vmem:[%s5 + $0x30] sm:$0xf]
      %v655 = vld [vmem:[%s5 + $0x34] sm:$0xf]
      %v656 = vld [vmem:[%s5 + $0x38] sm:$0xf]
      %v657 = vld [vmem:[%s5 + $0x3c] sm:$0xf]
      %v674 = vunpack.c.l.b16 %v642
      %v675 = vunpack.c.l.b16 %v643
      %v676 = vunpack.c.l.b16 %v644
      %v677 = vunpack.c.l.b16 %v645
      %v678 = vunpack.c.l.b16 %v646
      %v679 = vunpack.c.l.b16 %v647
      %v680 = vunpack.c.l.b16 %v648
      %v681 = vunpack.c.l.b16 %v649
      %v682 = vunpack.c.l.b16 %v650
      %v683 = vunpack.c.l.b16 %v651
      %v684 = vunpack.c.l.b16 %v652
      %v685 = vunpack.c.l.b16 %v653
      %v686 = vunpack.c.l.b16 %v654
      %v687 = vunpack.c.l.b16 %v655
      %v688 = vunpack.c.l.b16 %v656
      %v689 = vunpack.c.l.b16 %v657
      %v690 = vpack.c.b16 %v675, %v674
      %v691 = vpack.c.b16 %v677, %v676
      %v692 = vpack.c.b16 %v679, %v678
      %v693 = vpack.c.b16 %v681, %v680
      %v694 = vpack.c.b16 %v683, %v682
      %v695 = vpack.c.b16 %v685, %v684
      %v696 = vpack.c.b16 %v687, %v686
      %v697 = vpack.c.b16 %v689, %v688
      %706 = vmatprep.subr.bf16.mxu0 0
      %707 = vmatpush1.bf16.msra.mxu0 %v697
      %708 = vmatprep.subr.bf16.mxu0 0
      %709 = vmatpush1.bf16.msra.mxu0 %v696
      %710 = vmatprep.subr.bf16.mxu0 0
      %711 = vmatpush1.bf16.msra.mxu0 %v695
      %712 = vmatprep.subr.bf16.mxu0 0
      %713 = vmatpush1.bf16.msra.mxu0 %v694
      %714 = vmatprep.subr.bf16.mxu0 0
      %715 = vmatpush1.bf16.msra.mxu0 %v693
      %716 = vmatprep.subr.bf16.mxu0 0
      %717 = vmatpush1.bf16.msra.mxu0 %v692
      %718 = vmatprep.subr.bf16.mxu0 0
      %719 = vmatpush1.bf16.msra.mxu0 %v691
      %720 = vmatprep.subr.bf16.mxu0 0
      %721 = vmatpush1.bf16.msra.mxu0 %v690
      %722 = vmatprep.subr.bf16.mxu0 0
      %723 = vmatpush2.bf16.msra.mxu0 0
      %724 = vmatprep.subr.bf16.mxu0 0
      %725 = vmatpush2.bf16.msra.mxu0 0
      %726 = vmatprep.subr.bf16.mxu0 0
      %727 = vmatpush2.bf16.msra.mxu0 0
      %728 = vmatprep.subr.bf16.mxu0 0
      %729 = vmatpush2.bf16.msra.mxu0 0
      %730 = vmatprep.subr.bf16.mxu0 0
      %731 = vmatpush2.bf16.msra.mxu0 0
      %732 = vmatprep.subr.bf16.mxu0 0
      %733 = vmatpush2.bf16.msra.mxu0 0
      %734 = vmatprep.subr.bf16.mxu0 0
      %735 = vmatpush2.bf16.msra.mxu0 0
      %736 = vmatprep.subr.bf16.mxu0 0
      %737 = vmatpush2.bf16.msra.mxu0 0
      %738 = vmatprep.mubr.bf16.mxu0 0
      %739 = vmatmul.mubr.bf16.gmra.mxu0 %v641
      %v740 = vpop.f32.mrf.mxu0
      %v741 = vadd.f32 0.0, %v740
      %v742 = vpop.f32.mrf.mxu0
      %v743 = vpop.f32.mrf.mxu0
      %v744 = vpop.f32.mrf.mxu0
      %745 = vdwg.mxu0
      %v746 = vpack.c.bf16 %v741, %v741
      %747 = vst [vmem:[%s424] sm:$0xf] %v746
      %p748 = scmp.lt.s32.totalorder %s24, 1
      %s749 = scalar_select %p748, %s24, 1
      %p750 = scmp.lt.s32.totalorder %s25, 0
      %s751 = scalar_select %p750, %s25, 0
      %s752 = sadd.s32 %s751, %s749
      %s753 = smul.addr %s752, 4
      %s754 = scalar_lea.vmem %s6, %s753
      %p755 = scmp.lt.s32.totalorder %s24, 1
      %s756 = scalar_select %p755, %s24, 1
      %p757 = scmp.lt.s32.totalorder %s25, 0
      %s758 = scalar_select %p757, %s25, 0
      %s759 = sadd.s32 %s758, %s756
      %s760 = smul.addr %s759, 4
      %s761 = scalar_lea.vmem %s7, %s760
      %p762 = scmp.lt.s32.totalorder %s24, 1
      %s763 = scalar_select %p762, %s24, 1
      %p764 = scmp.lt.s32.totalorder %s25, 0
      %s765 = scalar_select %p764, %s25, 0
      %s766 = sadd.s32 %s765, %s763
      %s767 = smul.addr %s766, 4
      %s768 = scalar_lea.vmem %s8, %s767
      // Predicated region
      $region45: #{multi_head_attention.2} parent=43 // pred_check
        %p769 = pneg %p199
      $region46: #{multi_head_attention.2} parent=43 // pred_check_branch
        %771 = sbr.rel (%p769) target = $region48
      $region47: #{multi_head_attention.2} parent=43 // pred_region
        _
      $region48: #{multi_head_attention.2} parent=43 // pred_fallthru
        _
      // Predicated region
      $region49: #{multi_head_attention.2} parent=43 // pred_check
        %p772 = pneg %p227
      $region50: #{multi_head_attention.2} parent=43 // pred_check_branch
        %774 = sbr.rel (%p772) target = $region52
      $region51: #{multi_head_attention.2} parent=43 // pred_region
        _
      $region52: #{multi_head_attention.2} parent=43 // pred_fallthru
        _
      // Predicated region
      $region53: #{multi_head_attention.2} parent=43 // pred_check
        %p775 = pneg %p255
      $region54: #{multi_head_attention.2} parent=43 // pred_check_branch
        %777 = sbr.rel (%p775) target = $region56
      $region55: #{multi_head_attention.2} parent=43 // pred_region
        _
      $region56: #{multi_head_attention.2} parent=43 // pred_fallthru
        _
    $region44: #{multi_head_attention.2} parent=5 // pred_fallthru
      _
    %p778 = scmp.le.s32.totalorder 2, %s15
    // Predicated region
    $region57: #{multi_head_attention.2} parent=5 // pred_check
      %p779 = pneg %p778
    $region58: #{multi_head_attention.2} parent=5 // pred_check_branch
      %781 = sbr.rel (%p779) target = $region60
    $region59: #{multi_head_attention.2} parent=5 // pred_region
      %s782 = ssub.s32 %s15, 2
      // Predicated region
      $region61: #{multi_head_attention.2} parent=59 // pred_check
        %p783 = pneg %p205
      $region62: #{multi_head_attention.2} parent=59 // pred_check_branch
        %785 = sbr.rel (%p783) target = $region64
      $region63: #{multi_head_attention.2} parent=59 // pred_region
        %p786 = scmp.lt.s32.totalorder %s26, 1
        %s787 = scalar_select %p786, %s26, 1
        %p788 = scmp.lt.s32.totalorder %s27, 0
        %s789 = scalar_select %p788, %s27, 0
        %s790 = sadd.s32 %s789, %s787
        %s791 = smul.addr %s790, 4
        %s792 = scalar_lea.vmem %s6, %s791
      $region64: #{multi_head_attention.2} parent=59 // pred_fallthru
        _
      // Predicated region
      $region65: #{multi_head_attention.2} parent=59 // pred_check
        %p793 = pneg %p233
      $region66: #{multi_head_attention.2} parent=59 // pred_check_branch
        %795 = sbr.rel (%p793) target = $region68
      $region67: #{multi_head_attention.2} parent=59 // pred_region
        %p796 = scmp.lt.s32.totalorder %s26, 1
        %s797 = scalar_select %p796, %s26, 1
        %p798 = scmp.lt.s32.totalorder %s27, 0
        %s799 = scalar_select %p798, %s27, 0
        %s800 = sadd.s32 %s799, %s797
        %s801 = smul.addr %s800, 4
        %s802 = scalar_lea.vmem %s7, %s801
      $region68: #{multi_head_attention.2} parent=59 // pred_fallthru
        _
      // Predicated region
      $region69: #{multi_head_attention.2} parent=59 // pred_check
        %p803 = pneg %p261
      $region70: #{multi_head_attention.2} parent=59 // pred_check_branch
        %805 = sbr.rel (%p803) target = $region72
      $region71: #{multi_head_attention.2} parent=59 // pred_region
        %p806 = scmp.lt.s32.totalorder %s26, 1
        %s807 = scalar_select %p806, %s26, 1
        %p808 = scmp.lt.s32.totalorder %s27, 0
        %s809 = scalar_select %p808, %s27, 0
        %s810 = sadd.s32 %s809, %s807
        %s811 = smul.addr %s810, 4
        %s812 = scalar_lea.vmem %s8, %s811
      $region72: #{multi_head_attention.2} parent=59 // pred_fallthru
        _
    $region60: #{multi_head_attention.2} parent=5 // pred_fallthru
      _
  $region6: #{multi_head_attention.2} parent=0 // loop_footer
    %s19 = sadd.s32 1, %s15
  $region7: #{multi_head_attention.2} parent=0 // loop_footer_branch
    %14 = sbr.rel target = $region3
  $region8: #{multi_head_attention.2} parent=0 // loop_exit
    _

</llo_original>
